<compile_context>
chip_gen: v5e
topology: v5e:2x2
jax: 0.10.0
libtpu: 0.0.40
codegen_flags: <defaults>
</compile_context>

<pallas_src>
import jax
import jax.numpy as jnp
from jax.experimental import pallas as pl
from jax.experimental.pallas import tpu as pltpu


def _mlp_color_kernel(x_ref, w1_ref, b1_ref, w2_ref, b2_ref, w3_ref, b3_ref,
                      o_ref):
    # Fused 3-layer MLP + sigmoid on one row tile.
    # bf16 operands feed the MXU; accumulation / bias / activations stay f32.
    x = x_ref[...].astype(jnp.bfloat16)
    h = jnp.dot(x, w1_ref[...], preferred_element_type=jnp.float32)
    h = jnp.maximum(h + b1_ref[...], 0.0)
    h = jnp.dot(h.astype(jnp.bfloat16), w2_ref[...],
                preferred_element_type=jnp.float32)
    h = jnp.maximum(h + b2_ref[...], 0.0)
    out = jnp.dot(h.astype(jnp.bfloat16), w3_ref[...],
                  preferred_element_type=jnp.float32)
    out = out + b3_ref[...]
    # sigmoid(x) = 1 / (1 + exp(-x)): exp and approx reciprocal both run on
    # the EUP slot; output stays float32 (matches .float() in the module).
    o_ref[...] = pl.reciprocal(1.0 + jnp.exp(-out), approx=True).astype(o_ref.dtype)


def _round_up(x, m):
    return (x + m - 1) // m * m


def _vmem_budget_bytes():
    """Per-generation VMEM budget: ~48 MiB on v7x (64 MiB/TC physical),
    up to ~100 MiB on v5e/v6e (128 MiB physical). Conservative on failure."""
    try:
        phys = int(pltpu.get_tpu_info().vmem_capacity_bytes)
    except Exception:
        phys = 64 << 20  # assume the smallest current part (v7x per-TC)
    phys = max(32 << 20, min(phys, 128 << 20))
    return max(32 << 20, min(phys - (16 << 20), 100 << 20))


def _pick_tile_rows(n_rows, k_dim, h_dim, o_dim, x_itemsize, requested_rows,
                    vmem_budget):
    """Derive the row tile from the VMEM budget instead of the other way around."""
    lanes = lambda v: _round_up(v, 128)
    per_row = (2 * lanes(k_dim) * x_itemsize     # x block, double-buffered
               + 2 * lanes(o_dim) * 4            # out block (f32), double-buffered
               + lanes(k_dim) * 2                # bf16 cast of x
               + 2 * lanes(h_dim) * (4 + 2)      # two hidden layers: f32 + bf16
               + 3 * lanes(o_dim) * 4)           # pre-sigmoid f32 + exp/recip temps
    const = 6 << 20                              # resident weights (x2 bufs) + slack
    fit_rows = max(8, (max(vmem_budget - const, 1 << 20)) // per_row)
    rows = min(requested_rows, fit_rows)
    # Guarantee >=2 grid steps so v7x's second TensorCore gets work.
    if n_rows > 8:
        rows = min(rows, _round_up(pl.cdiv(n_rows, 2), 8))
    rows = min(rows, _round_up(n_rows, 8))
    return max(8, (rows // 8) * 8)


def volume_color_forward(features, params, *, tile_n=8192):
    """features: (..., C_in) array. Returns (..., 3) float32 colors.

    tile_n is the number of *samples* per grid step (primary tuning knob)."""
    w1, b1, w2, b2, w3, b3 = params
    b1, b2, b3 = (b.reshape(1, -1) for b in (b1, b2, b3))
    c_in = features.shape[-1]
    hidden = w1.shape[1]
    c_out = w3.shape[1]
    lead_shape = features.shape[:-1]

    # Flatten rows; keep the input dtype (cast to bf16 happens in-kernel, so a
    # bf16 producer gets halved x HBM traffic for free and f32 gets no extra
    # wrapper-side HBM pass).
    x = features.reshape(-1, c_in)
    n = x.shape[0]

    # ---- sample packing (lane-dense MXU feed) -------------------------------
    pack = 1
    if 0 < c_in < 128 and 128 % c_in == 0:
        cand = min(128 // c_in, 16)          # cap so packed weights stay small
        if cand > 1 and n % cand == 0:
            pack = cand

    if pack > 1:
        # Free row-major view: `pack` samples ride one lane-dense row.
        x_k = x.reshape(n // pack, pack * c_in)
        eye = jnp.eye(pack, dtype=jnp.float32)
        w1k = jnp.kron(eye, w1.astype(jnp.float32)).astype(jnp.bfloat16)
        w2k = jnp.kron(eye, w2.astype(jnp.float32)).astype(jnp.bfloat16)
        w3k = jnp.kron(eye, w3.astype(jnp.float32)).astype(jnp.bfloat16)
        b1k = jnp.tile(b1.astype(jnp.float32), (1, pack))
        b2k = jnp.tile(b2.astype(jnp.float32), (1, pack))
        b3k = jnp.tile(b3.astype(jnp.float32), (1, pack))
    else:
        # Fallback (ragged N or awkward C_in): original unpacked layout with a
        # masked partial last block; no padded HBM copy of x.
        x_k = x
        w1k, w2k, w3k = (w.astype(jnp.bfloat16) for w in (w1, w2, w3))
        b1k, b2k, b3k = (b.astype(jnp.float32) for b in (b1, b2, b3))

    n_rows, k_dim = x_k.shape
    h_dim = hidden * pack
    o_dim = c_out * pack

    vmem_budget = _vmem_budget_bytes()
    req_rows = max(8, _round_up(max(tile_n // pack, 1), 8))
    rows = _pick_tile_rows(n_rows, k_dim, h_dim, o_dim, x_k.dtype.itemsize,
                           req_rows, vmem_budget)
    grid = (pl.cdiv(n_rows, rows),)

    full = lambda a: pl.BlockSpec(a.shape, lambda i: (0,) * a.ndim)

    out = pl.pallas_call(
        _mlp_color_kernel,
        out_shape=jax.ShapeDtypeStruct((n_rows, o_dim), jnp.float32),
        grid_spec=pltpu.PrefetchScalarGridSpec(
            num_scalar_prefetch=0,
            grid=grid,
            in_specs=[
                pl.BlockSpec((rows, k_dim), lambda i: (i, 0)),   # x rows
                full(w1k), full(b1k),
                full(w2k), full(b2k),
                full(w3k), full(b3k),
            ],
            out_specs=pl.BlockSpec((rows, o_dim), lambda i: (i, 0)),
        ),
        compiler_params=pltpu.CompilerParams(
            dimension_semantics=("parallel",),
            vmem_limit_bytes=int(vmem_budget)),
    )(x_k, w1k, b1k, w2k, b2k, w3k, b3k)

    # (N/pack, pack*3) -> (..., 3) is a free row-major reshape.
    return out.reshape(*lead_shape, c_out)


def init_params(key, c_in, hidden=64, c_out=3):
    """Deterministic Linear inits (PyTorch-style uniform), stored as (in, out)."""
    ks = jax.random.split(key, 6)

    def linear(kw, kb, fan_in, fan_out):
        bound = 1.0 / jnp.sqrt(fan_in)
        w = jax.random.uniform(kw, (fan_in, fan_out), jnp.float32, -bound, bound)
        b = jax.random.uniform(kb, (1, fan_out), jnp.float32, -bound, bound)
        return w, b

    w1, b1 = linear(ks[0], ks[1], c_in, hidden)
    w2, b2 = linear(ks[2], ks[3], hidden, hidden)
    w3, b3 = linear(ks[4], ks[5], hidden, c_out)
    return (w1, b1, w2, b2, w3, b3)


def _reference(features, params):
    # Pure-f32 reference (matches the PyTorch module's math).
    w1, b1, w2, b2, w3, b3 = params
    x = features.reshape(-1, features.shape[-1]).astype(jnp.float32)
    h = jnp.maximum(x @ w1 + b1, 0.0)
    h = jnp.maximum(h @ w2 + b2, 0.0)
    out = jax.nn.sigmoid(h @ w3 + b3)
    return out.reshape(*features.shape[:-1], 3)


if __name__ == "__main__":
    key = jax.random.PRNGKey(0)
    k_feat, k_params = jax.random.split(key)

    # Small shapes: batch=2, spatial=16x16, input_feature_dim=16.
    B, H, W, C_IN = 2, 16, 16, 16
    features = jax.random.normal(k_feat, (B, H, W, C_IN), jnp.float32)
    params = init_params(k_params, C_IN)

    color = jax.block_until_ready(volume_color_forward(features, params))
    ref = _reference(features, params)
    assert color.shape == (B, H, W, 3)
    assert color.dtype == jnp.float32
    # bf16 MXU operands + f32 accumulation (+ approx-reciprocal sigmoid) vs
    # pure-f32 reference: loose atol.
    assert jnp.allclose(color, ref, atol=3e-2, rtol=0.0), \
        float(jnp.max(jnp.abs(color - ref)))

    # Ragged row count (100 rows, not a multiple of the packing factor):
    # exercises the unpacked fallback path + masked partial last block.
    feat2 = jax.random.normal(jax.random.PRNGKey(1), (1, 10, 10, C_IN),
                              jnp.float32)
    color2 = jax.block_until_ready(volume_color_forward(feat2, params))
    ref2 = _reference(feat2, params)
    assert color2.shape == (1, 10, 10, 3)
    assert jnp.allclose(color2, ref2, atol=3e-2, rtol=0.0), \
        float(jnp.max(jnp.abs(color2 - ref2)))

    print("KERNEL_OK")
</pallas_src>

<mosaic_0001>
module attributes {stable_mosaic.version = 11 : i64} {
  func.func @_mlp_color_kernel(%arg0: i32, %arg1: memref<32x128xf32, #tpu.memory_space<vmem>>, %arg2: memref<128x512xbf16, #tpu.memory_space<vmem>>, %arg3: memref<1x512xf32, #tpu.memory_space<vmem>>, %arg4: memref<512x512xbf16, #tpu.memory_space<vmem>>, %arg5: memref<1x512xf32, #tpu.memory_space<vmem>>, %arg6: memref<512x24xbf16, #tpu.memory_space<vmem>>, %arg7: memref<1x24xf32, #tpu.memory_space<vmem>>, %arg8: memref<32x24xf32, #tpu.memory_space<vmem>>) attributes {dimension_semantics = [#tpu.dimension_semantics<parallel>], iteration_bounds = array<i64: 2>, scalar_prefetch = 0 : i64, scratch_operands = 0 : i64, tpu.core_type = #tpu.core_type<tc>, window_params = [{transform_indices = @transform_0, window_bounds = array<i64: 32, 128>}, {pipeline_mode = #tpu.pipeline_mode<synchronous>, transform_indices = @transform_1, window_bounds = array<i64: 128, 512>}, {pipeline_mode = #tpu.pipeline_mode<synchronous>, transform_indices = @transform_2, window_bounds = array<i64: 1, 512>}, {pipeline_mode = #tpu.pipeline_mode<synchronous>, transform_indices = @transform_3, window_bounds = array<i64: 512, 512>}, {pipeline_mode = #tpu.pipeline_mode<synchronous>, transform_indices = @transform_4, window_bounds = array<i64: 1, 512>}, {pipeline_mode = #tpu.pipeline_mode<synchronous>, transform_indices = @transform_5, window_bounds = array<i64: 512, 24>}, {pipeline_mode = #tpu.pipeline_mode<synchronous>, transform_indices = @transform_6, window_bounds = array<i64: 1, 24>}, {transform_indices = @transform_7, window_bounds = array<i64: 32, 24>}]} {
    %c0 = arith.constant 0 : index
    %c0_0 = arith.constant 0 : index
    %0 = vector.load %arg1[%c0, %c0_0] : memref<32x128xf32, #tpu.memory_space<vmem>>, vector<32x128xf32>
    %1 = arith.truncf %0 : vector<32x128xf32> to vector<32x128xbf16>
    %c0_1 = arith.constant 0 : index
    %c0_2 = arith.constant 0 : index
    %2 = vector.load %arg2[%c0_1, %c0_2] : memref<128x512xbf16, #tpu.memory_space<vmem>>, vector<128x512xbf16>
    %cst = arith.constant dense<0.000000e+00> : vector<32x512xf32>
    %3 = tpu.matmul %1, %2, %cst {dimension_numbers = #tpu.dot_dimension_numbers<[1], [0], [0], [1], [0, 0, 1, 1], [], []>} : vector<32x128xbf16>, vector<128x512xbf16>, vector<32x512xf32> -> vector<32x512xf32>
    %c0_3 = arith.constant 0 : index
    %c0_4 = arith.constant 0 : index
    %4 = vector.load %arg3[%c0_3, %c0_4] : memref<1x512xf32, #tpu.memory_space<vmem>>, vector<1x512xf32>
    %5 = vector.broadcast %4 : vector<1x512xf32> to vector<32x512xf32>
    %6 = arith.addf %3, %5 : vector<32x512xf32>
    %cst_5 = arith.constant 0.000000e+00 : f32
    %7 = vector.broadcast %cst_5 : f32 to vector<32x512xf32>
    %8 = arith.maximumf %6, %7 : vector<32x512xf32>
    %9 = arith.truncf %8 : vector<32x512xf32> to vector<32x512xbf16>
    %c0_6 = arith.constant 0 : index
    %c0_7 = arith.constant 0 : index
    %10 = vector.load %arg4[%c0_6, %c0_7] : memref<512x512xbf16, #tpu.memory_space<vmem>>, vector<512x512xbf16>
    %cst_8 = arith.constant dense<0.000000e+00> : vector<32x512xf32>
    %11 = tpu.matmul %9, %10, %cst_8 {dimension_numbers = #tpu.dot_dimension_numbers<[1], [0], [0], [1], [0, 0, 1, 1], [], []>} : vector<32x512xbf16>, vector<512x512xbf16>, vector<32x512xf32> -> vector<32x512xf32>
    %c0_9 = arith.constant 0 : index
    %c0_10 = arith.constant 0 : index
    %12 = vector.load %arg5[%c0_9, %c0_10] : memref<1x512xf32, #tpu.memory_space<vmem>>, vector<1x512xf32>
    %13 = vector.broadcast %12 : vector<1x512xf32> to vector<32x512xf32>
    %14 = arith.addf %11, %13 : vector<32x512xf32>
    %cst_11 = arith.constant 0.000000e+00 : f32
    %15 = vector.broadcast %cst_11 : f32 to vector<32x512xf32>
    %16 = arith.maximumf %14, %15 : vector<32x512xf32>
    %17 = arith.truncf %16 : vector<32x512xf32> to vector<32x512xbf16>
    %c0_12 = arith.constant 0 : index
    %c0_13 = arith.constant 0 : index
    %18 = vector.load %arg6[%c0_12, %c0_13] : memref<512x24xbf16, #tpu.memory_space<vmem>>, vector<512x24xbf16>
    %cst_14 = arith.constant dense<0.000000e+00> : vector<32x24xf32>
    %19 = tpu.matmul %17, %18, %cst_14 {dimension_numbers = #tpu.dot_dimension_numbers<[1], [0], [0], [1], [0, 0, 1, 1], [], []>} : vector<32x512xbf16>, vector<512x24xbf16>, vector<32x24xf32> -> vector<32x24xf32>
    %c0_15 = arith.constant 0 : index
    %c0_16 = arith.constant 0 : index
    %20 = vector.load %arg7[%c0_15, %c0_16] : memref<1x24xf32, #tpu.memory_space<vmem>>, vector<1x24xf32>
    %21 = vector.broadcast %20 : vector<1x24xf32> to vector<32x24xf32>
    %22 = arith.addf %19, %21 : vector<32x24xf32>
    %cst_17 = arith.constant 0.000000e+00 : f32
    %23 = vector.broadcast %cst_17 : f32 to vector<32x24xf32>
    %24 = arith.subf %23, %22 : vector<32x24xf32>
    %25 = math.exp %24 : vector<32x24xf32>
    %cst_18 = arith.constant 1.000000e+00 : f32
    %26 = vector.broadcast %cst_18 : f32 to vector<32x24xf32>
    %27 = arith.addf %26, %25 : vector<32x24xf32>
    %28 = tpu.reciprocal %27 {approx = true} : vector<32x24xf32> -> vector<32x24xf32>
    %c0_19 = arith.constant 0 : index
    %c0_20 = arith.constant 0 : index
    %29 = vector.load %arg8[%c0_19, %c0_20] : memref<32x24xf32, #tpu.memory_space<vmem>>, vector<32x24xf32>
    tpu.vector_store %arg8[%c0_19, %c0_20], %28 {strides = array<i32>} : memref<32x24xf32, #tpu.memory_space<vmem>>, vector<32x24xf32>,
    return
  }
  func.func @transform_0(%arg0: i32) -> (i32, i32) {
    %c0_i32 = arith.constant 0 : i32
    %c0_i32_0 = arith.constant 0 : i32
    return %arg0, %c0_i32 : i32, i32
  }
  func.func @transform_1(%arg0: i32) -> (i32, i32) {
    %c0_i32 = arith.constant 0 : i32
    %c0_i32_0 = arith.constant 0 : i32
    %c0_i32_1 = arith.constant 0 : i32
    return %c0_i32, %c0_i32_0 : i32, i32
  }
  func.func @transform_2(%arg0: i32) -> (i32, i32) {
    %c0_i32 = arith.constant 0 : i32
    %c0_i32_0 = arith.constant 0 : i32
    %c0_i32_1 = arith.constant 0 : i32
    return %c0_i32, %c0_i32_0 : i32, i32
  }
  func.func @transform_3(%arg0: i32) -> (i32, i32) {
    %c0_i32 = arith.constant 0 : i32
    %c0_i32_0 = arith.constant 0 : i32
    %c0_i32_1 = arith.constant 0 : i32
    return %c0_i32, %c0_i32_0 : i32, i32
  }
  func.func @transform_4(%arg0: i32) -> (i32, i32) {
    %c0_i32 = arith.constant 0 : i32
    %c0_i32_0 = arith.constant 0 : i32
    %c0_i32_1 = arith.constant 0 : i32
    return %c0_i32, %c0_i32_0 : i32, i32
  }
  func.func @transform_5(%arg0: i32) -> (i32, i32) {
    %c0_i32 = arith.constant 0 : i32
    %c0_i32_0 = arith.constant 0 : i32
    %c0_i32_1 = arith.constant 0 : i32
    return %c0_i32, %c0_i32_0 : i32, i32
  }
  func.func @transform_6(%arg0: i32) -> (i32, i32) {
    %c0_i32 = arith.constant 0 : i32
    %c0_i32_0 = arith.constant 0 : i32
    %c0_i32_1 = arith.constant 0 : i32
    return %c0_i32, %c0_i32_0 : i32, i32
  }
  func.func @transform_7(%arg0: i32) -> (i32, i32) {
    %c0_i32 = arith.constant 0 : i32
    %c0_i32_0 = arith.constant 0 : i32
    return %arg0, %c0_i32 : i32, i32
  }
}

</mosaic_0001>

<llo_original>
// kernel: tpu_custom_call.1
$region0: #{tpu_custom_call.1}
  #allocation0 [shape = 'u32[]', space=smem, size = 0x4, offset = 0x4, fixed_abs, tag = 'smem constant byte address 0x4 - core index']
  #allocation1 [shape = 'u32[72,128]{1,0:T(1,128)}', space=vmem, size = 0x9000, scoped, tag = 'internal scratch']
  %s0 = inlined_call_operand.hbm [shape: f32[64,128], index: 0, kind: input, shape index: {}]
  %s1 = inlined_call_operand.vmem [shape: bf16[128,512], index: 1, kind: input, shape index: {}]
  %s2 = inlined_call_operand.vmem [shape: f32[1,512], index: 2, kind: input, shape index: {}]
  %s3 = inlined_call_operand.hbm [shape: bf16[512,512], index: 3, kind: input, shape index: {}]
  %s4 = inlined_call_operand.vmem [shape: f32[1,512], index: 4, kind: input, shape index: {}]
  %s5 = inlined_call_operand.vmem [shape: bf16[512,24], index: 5, kind: input, shape index: {}]
  %s6 = inlined_call_operand.vmem [shape: f32[1,24], index: 6, kind: input, shape index: {}]
  %s7 = inlined_call_operand.vmem [shape: f32[64,24], index: 7, kind: output, shape index: {}]
  %s8 = sld [smem:[#allocation0]]
  $region69: #{tpu_custom_call.1} parent=0
    _
  %s10 = ssub.s32 1, %s8
  %s11 = scalar_select 0, %s10, %s8
  $region1: #{tpu_custom_call.1} parent=0
    #allocation2 [shape = 'u8[32768]{0}', space=vmem, size = 0x8000, scoped, tag = 'input window, operand 0']
    #allocation3 [shape = 's32[2]{0}', space=sflag, size = 0x8, scoped, tag = 'scoped memory for tpu_custom_call.1']
    #allocation4 [shape = 'u8[524288]{0}', space=vmem, size = 0x80000, scoped, tag = 'input window, operand 3, single buffered']
    #allocation5 [shape = 's32[1]{0}', space=sflag, size = 0x4, scoped, tag = 'scoped memory for tpu_custom_call.1']
    %12 = vsyncpa [#allocation3], 0
    %s13 = scalar_lea.sflag [#allocation3], 1
    %14 = vsyncpa %s13, 0
    %15 = vsyncpa [#allocation5], 0
    loop: start=0, step=1, limit=4
    $region2: #{tpu_custom_call.1} parent=1 // loop_pre_header
      _
    $region3: #{tpu_custom_call.1} parent=1 // loop_header
      %s17 = sphi 0, %s21
      %p18 = scmp.ge.s32.totalorder %s17, 4
      %s27 = sphi 0, %s29
      %s30 = sphi 0, %s27
      %s31 = sphi 0, %s30
      %s47 = sphi 0, %s31
      %s51 = sphi 0, %s51
      %s53 = sphi 0, %s51
      %s54 = sphi 0, %s53
      %s68 = sphi 0, %s54
      %s72 = sphi 0, %s72
      %s74 = sphi 0, %s72
      %s75 = sphi 0, %s74
      %s89 = sphi 0, %s75
      %s93 = sphi 0, %s93
      %s95 = sphi 0, %s93
      %s96 = sphi 0, %s95
      %s110 = sphi 0, %s96
      %s114 = sphi 0, %s114
      %s116 = sphi 0, %s114
      %s117 = sphi 0, %s116
      %s131 = sphi 0, %s117
      %s135 = sphi 0, %s135
      %s137 = sphi 0, %s135
      %s138 = sphi 0, %s137
      %s152 = sphi 0, %s138
      %s156 = sphi 0, %s156
      %s158 = sphi 0, %s156
      %s159 = sphi 0, %s158
      %s173 = sphi 0, %s159
      %s179 = sphi 0, %s181
      %s182 = sphi 0, %s179
      %s183 = sphi 0, %s182
      %s199 = sphi 0, %s183
    $region4: #{tpu_custom_call.1} parent=1 // loop_header_branch
      %20 = sbr.rel (%p18) target = $region8
    $region5: #{tpu_custom_call.1} parent=1 // loop_body
      %s22 = ssub.s32 %s17, 1
      %s23 = ssub.s32 %s17, 2
      %s24 = sadd.s32 %s17, 1
      %s25 = ssub.s32 %s17, %s24
      %p26 = scmp.eq.s32.totalorder %s25, 0
      %s28 = sadd.s32 %s27, 1
      %s29 = scalar_select %p26, %s27, %s28
      %p32 = pneg %p26
      %p33 = scmp.eq.s32.totalorder %s17, 1
      %p34 = por %p32, %p33
      %p35 = scmp.ne.s32.totalorder %s27, %s30
      %p36 = scmp.eq.s32.totalorder %s17, 0
      %p37 = por %p35, %p36
      %p38 = scmp.ne.s32.totalorder %s27, %s30
      %p39 = scmp.eq.s32.totalorder %s22, 1
      %p40 = por %p38, %p39
      %p41 = scmp.ne.s32.totalorder %s30, %s31
      %p42 = scmp.eq.s32.totalorder %s22, 0
      %p43 = por %p41, %p42
      %p44 = scmp.ne.s32.totalorder %s30, %s31
      %p45 = scmp.eq.s32.totalorder %s23, 1
      %p46 = por %p44, %p45
      %p48 = scmp.ne.s32.totalorder %s31, %s47
      %p49 = scmp.eq.s32.totalorder %s23, 0
      %p50 = por %p48, %p49
      %s52 = sadd.s32 %s51, 1
      %p55 = scmp.eq.s32.totalorder %s17, 1
      %p56 = scmp.ne.s32.totalorder %s51, %s53
      %p57 = scmp.eq.s32.totalorder %s17, 0
      %p58 = por %p56, %p57
      %p59 = scmp.ne.s32.totalorder %s51, %s53
      %p60 = scmp.eq.s32.totalorder %s22, 1
      %p61 = por %p59, %p60
      %p62 = scmp.ne.s32.totalorder %s53, %s54
      %p63 = scmp.eq.s32.totalorder %s22, 0
      %p64 = por %p62, %p63
      %p65 = scmp.ne.s32.totalorder %s53, %s54
      %p66 = scmp.eq.s32.totalorder %s23, 1
      %p67 = por %p65, %p66
      %p69 = scmp.ne.s32.totalorder %s54, %s68
      %p70 = scmp.eq.s32.totalorder %s23, 0
      %p71 = por %p69, %p70
      %s73 = sadd.s32 %s72, 1
      %p76 = scmp.eq.s32.totalorder %s17, 1
      %p77 = scmp.ne.s32.totalorder %s72, %s74
      %p78 = scmp.eq.s32.totalorder %s17, 0
      %p79 = por %p77, %p78
      %p80 = scmp.ne.s32.totalorder %s72, %s74
      %p81 = scmp.eq.s32.totalorder %s22, 1
      %p82 = por %p80, %p81
      %p83 = scmp.ne.s32.totalorder %s74, %s75
      %p84 = scmp.eq.s32.totalorder %s22, 0
      %p85 = por %p83, %p84
      %p86 = scmp.ne.s32.totalorder %s74, %s75
      %p87 = scmp.eq.s32.totalorder %s23, 1
      %p88 = por %p86, %p87
      %p90 = scmp.ne.s32.totalorder %s75, %s89
      %p91 = scmp.eq.s32.totalorder %s23, 0
      %p92 = por %p90, %p91
      %s94 = sadd.s32 %s93, 1
      %p97 = scmp.eq.s32.totalorder %s17, 1
      %p98 = scmp.ne.s32.totalorder %s93, %s95
      %p99 = scmp.eq.s32.totalorder %s17, 0
      %p100 = por %p98, %p99
      %p101 = scmp.ne.s32.totalorder %s93, %s95
      %p102 = scmp.eq.s32.totalorder %s22, 1
      %p103 = por %p101, %p102
      %p104 = scmp.ne.s32.totalorder %s95, %s96
      %p105 = scmp.eq.s32.totalorder %s22, 0
      %p106 = por %p104, %p105
      %p107 = scmp.ne.s32.totalorder %s95, %s96
      %p108 = scmp.eq.s32.totalorder %s23, 1
      %p109 = por %p107, %p108
      %p111 = scmp.ne.s32.totalorder %s96, %s110
      %p112 = scmp.eq.s32.totalorder %s23, 0
      %p113 = por %p111, %p112
      %s115 = sadd.s32 %s114, 1
      %p118 = scmp.eq.s32.totalorder %s17, 1
      %p119 = scmp.ne.s32.totalorder %s114, %s116
      %p120 = scmp.eq.s32.totalorder %s17, 0
      %p121 = por %p119, %p120
      %p122 = scmp.ne.s32.totalorder %s114, %s116
      %p123 = scmp.eq.s32.totalorder %s22, 1
      %p124 = por %p122, %p123
      %p125 = scmp.ne.s32.totalorder %s116, %s117
      %p126 = scmp.eq.s32.totalorder %s22, 0
      %p127 = por %p125, %p126
      %p128 = scmp.ne.s32.totalorder %s116, %s117
      %p129 = scmp.eq.s32.totalorder %s23, 1
      %p130 = por %p128, %p129
      %p132 = scmp.ne.s32.totalorder %s117, %s131
      %p133 = scmp.eq.s32.totalorder %s23, 0
      %p134 = por %p132, %p133
      %s136 = sadd.s32 %s135, 1
      %p139 = scmp.eq.s32.totalorder %s17, 1
      %p140 = scmp.ne.s32.totalorder %s135, %s137
      %p141 = scmp.eq.s32.totalorder %s17, 0
      %p142 = por %p140, %p141
      %p143 = scmp.ne.s32.totalorder %s135, %s137
      %p144 = scmp.eq.s32.totalorder %s22, 1
      %p145 = por %p143, %p144
      %p146 = scmp.ne.s32.totalorder %s137, %s138
      %p147 = scmp.eq.s32.totalorder %s22, 0
      %p148 = por %p146, %p147
      %p149 = scmp.ne.s32.totalorder %s137, %s138
      %p150 = scmp.eq.s32.totalorder %s23, 1
      %p151 = por %p149, %p150
      %p153 = scmp.ne.s32.totalorder %s138, %s152
      %p154 = scmp.eq.s32.totalorder %s23, 0
      %p155 = por %p153, %p154
      %s157 = sadd.s32 %s156, 1
      %p160 = scmp.eq.s32.totalorder %s17, 1
      %p161 = scmp.ne.s32.totalorder %s156, %s158
      %p162 = scmp.eq.s32.totalorder %s17, 0
      %p163 = por %p161, %p162
      %p164 = scmp.ne.s32.totalorder %s156, %s158
      %p165 = scmp.eq.s32.totalorder %s22, 1
      %p166 = por %p164, %p165
      %p167 = scmp.ne.s32.totalorder %s158, %s159
      %p168 = scmp.eq.s32.totalorder %s22, 0
      %p169 = por %p167, %p168
      %p170 = scmp.ne.s32.totalorder %s158, %s159
      %p171 = scmp.eq.s32.totalorder %s23, 1
      %p172 = por %p170, %p171
      %p174 = scmp.ne.s32.totalorder %s159, %s173
      %p175 = scmp.eq.s32.totalorder %s23, 0
      %p176 = por %p174, %p175
      %s177 = ssub.s32 %s17, %s24
      %p178 = scmp.eq.s32.totalorder %s177, 0
      %s180 = sadd.s32 %s179, 1
      %s181 = scalar_select %p178, %s179, %s180
      %p184 = pneg %p178
      %p185 = scmp.eq.s32.totalorder %s17, 1
      %p186 = por %p184, %p185
      %p187 = scmp.ne.s32.totalorder %s179, %s182
      %p188 = scmp.eq.s32.totalorder %s17, 0
      %p189 = por %p187, %p188
      %p190 = scmp.ne.s32.totalorder %s179, %s182
      %p191 = scmp.eq.s32.totalorder %s22, 1
      %p192 = por %p190, %p191
      %p193 = scmp.ne.s32.totalorder %s182, %s183
      %p194 = scmp.eq.s32.totalorder %s22, 0
      %p195 = por %p193, %p194
      %p196 = scmp.ne.s32.totalorder %s182, %s183
      %p197 = scmp.eq.s32.totalorder %s23, 1
      %p198 = por %p196, %p197
      %p200 = scmp.ne.s32.totalorder %s183, %s199
      %p201 = scmp.eq.s32.totalorder %s23, 0
      %p202 = por %p200, %p201
      %p203 = scmp.le.s32.totalorder 1, %s17
      %p204 = scmp.lt.s32.totalorder %s17, 3
      %p205 = pnand %p203, %p204
      %p206 = pneg %p205
      // Predicated region
      $region9: #{tpu_custom_call.1} parent=5 // pred_check
        _
      $region10: #{tpu_custom_call.1} parent=5 // pred_check_branch
        %208 = sbr.rel (%p205) target = $region12
      $region11: #{tpu_custom_call.1} parent=5 // pred_region
        %s209 = ssub.s32 %s17, 1
        // Predicated region
        $region13: #{tpu_custom_call.1} parent=11 // pred_check
          %p210 = pneg %p64
        $region14: #{tpu_custom_call.1} parent=11 // pred_check_branch
          %212 = sbr.rel (%p210) target = $region16
        $region15: #{tpu_custom_call.1} parent=11 // pred_region
          _
        $region16: #{tpu_custom_call.1} parent=11 // pred_fallthru
          _
        // Predicated region
        $region17: #{tpu_custom_call.1} parent=11 // pred_check
          %p213 = pneg %p85
        $region18: #{tpu_custom_call.1} parent=11 // pred_check_branch
          %215 = sbr.rel (%p213) target = $region20
        $region19: #{tpu_custom_call.1} parent=11 // pred_region
          _
        $region20: #{tpu_custom_call.1} parent=11 // pred_fallthru
          _
        // Predicated region
        $region21: #{tpu_custom_call.1} parent=11 // pred_check
          %p216 = pneg %p106
        $region22: #{tpu_custom_call.1} parent=11 // pred_check_branch
          %218 = sbr.rel (%p216) target = $region24
        $region23: #{tpu_custom_call.1} parent=11 // pred_region
          %220 = vsyncadd [#allocation5], 0
          %s221 = sshll.u32 %s3, 4
          %s222 = int_to_ptr.hbm [resolvable:$true] %s221
          %s223 = sshll.u32 [#allocation4], 4
          %s224 = int_to_ptr.vmem [resolvable:$true] %s223
          %229 = dma.hbm_to_vmem [thread:$0]  %s222, 16384, %s224, [#allocation5], 256, 256, 16
        $region24: #{tpu_custom_call.1} parent=11 // pred_fallthru
          _
        // Predicated region
        $region25: #{tpu_custom_call.1} parent=11 // pred_check
          %p230 = pneg %p127
        $region26: #{tpu_custom_call.1} parent=11 // pred_check_branch
          %232 = sbr.rel (%p230) target = $region28
        $region27: #{tpu_custom_call.1} parent=11 // pred_region
          _
        $region28: #{tpu_custom_call.1} parent=11 // pred_fallthru
          _
        // Predicated region
        $region29: #{tpu_custom_call.1} parent=11 // pred_check
          %p233 = pneg %p148
        $region30: #{tpu_custom_call.1} parent=11 // pred_check_branch
          %235 = sbr.rel (%p233) target = $region32
        $region31: #{tpu_custom_call.1} parent=11 // pred_region
          _
        $region32: #{tpu_custom_call.1} parent=11 // pred_fallthru
          _
        // Predicated region
        $region33: #{tpu_custom_call.1} parent=11 // pred_check
          %p236 = pneg %p169
        $region34: #{tpu_custom_call.1} parent=11 // pred_check_branch
          %238 = sbr.rel (%p236) target = $region36
        $region35: #{tpu_custom_call.1} parent=11 // pred_region
          _
        $region36: #{tpu_custom_call.1} parent=11 // pred_fallthru
          _
      $region12: #{tpu_custom_call.1} parent=5 // pred_fallthru
        _
      %p239 = scmp.lt.s32.totalorder %s17, 2
      // Predicated region
      $region37: #{tpu_custom_call.1} parent=5 // pred_check
        %p240 = pneg %p239
      $region38: #{tpu_custom_call.1} parent=5 // pred_check_branch
        %242 = sbr.rel (%p240) target = $region40
      $region39: #{tpu_custom_call.1} parent=5 // pred_region
        // Predicated region
        $region41: #{tpu_custom_call.1} parent=39 // pred_check
          %p243 = pneg %p37
        $region42: #{tpu_custom_call.1} parent=39 // pred_check_branch
          %245 = sbr.rel (%p243) target = $region44
        $region43: #{tpu_custom_call.1} parent=39 // pred_region
          %s246 = sand.u32 %s27, 1
          %s247 = scalar_lea.sflag [#allocation3], %s246
          %s248 = sand.u32 %s27, 1
          %s249 = smul.addr %s248, 32
          %s250 = scalar_lea.vmem [#allocation2], %s249
          %s251 = smul.u32 4, %s17
          %253 = vsyncadd %s247, 0
          %s254 = smul.addr %s251, 8
          %s255 = scalar_lea.hbm %s0, %s254
          %s256 = sshll.u32 %s255, 4
          %s257 = int_to_ptr.hbm [resolvable:$true] %s256
          %s258 = sshll.u32 %s250, 4
          %s259 = int_to_ptr.vmem [resolvable:$true] %s258
          %264 = dma.hbm_to_vmem [thread:$0]  %s257, 512, %s259, %s247, 128, 128, 8
        $region44: #{tpu_custom_call.1} parent=39 // pred_fallthru
          _
      $region40: #{tpu_custom_call.1} parent=5 // pred_fallthru
        _
      %p265 = scmp.le.s32.totalorder 1, %s17
      %p266 = scmp.lt.s32.totalorder %s17, 3
      %p267 = pnand %p265, %p266
      %p268 = pneg %p267
      // Predicated region
      $region45: #{tpu_custom_call.1} parent=5 // pred_check
        _
      $region46: #{tpu_custom_call.1} parent=5 // pred_check_branch
        %270 = sbr.rel (%p267) target = $region48
      $region47: #{tpu_custom_call.1} parent=5 // pred_region
        %s271 = ssub.s32 %s17, 1
        %s272 = sand.u32 %s30, 1
        %s273 = scalar_lea.sflag [#allocation3], %s272
        %s274 = sand.u32 %s30, 1
        %s275 = smul.addr %s274, 32
        %s276 = scalar_lea.vmem [#allocation2], %s275
        // Predicated region
        $region49: #{tpu_custom_call.1} parent=47 // pred_check
          %p277 = pneg %p43
        $region50: #{tpu_custom_call.1} parent=47 // pred_check_branch
          %279 = sbr.rel (%p277) target = $region52
        $region51: #{tpu_custom_call.1} parent=47 // pred_region
          %281 = dma.done %s273, 512
        $region52: #{tpu_custom_call.1} parent=47 // pred_fallthru
          _
        // Predicated region
        $region53: #{tpu_custom_call.1} parent=47 // pred_check
          %p282 = pneg %p106
        $region54: #{tpu_custom_call.1} parent=47 // pred_check_branch
          %284 = sbr.rel (%p282) target = $region56
        $region55: #{tpu_custom_call.1} parent=47 // pred_region
          %286 = dma.done [#allocation5], 16384
        $region56: #{tpu_custom_call.1} parent=47 // pred_fallthru
          _
        %s287 = sand.u32 %s30, 1
        %s288 = scalar_lea.sflag [#allocation3], %s287
        %s289 = sand.u32 %s30, 1
        %s290 = smul.addr %s289, 32
        %s291 = scalar_lea.vmem [#allocation2], %s290
        %p292 = pneg %p43
        %p293 = pneg %p40
        %p294 = pneg %p64
        %p295 = pneg %p61
        %p296 = pneg %p85
        %p297 = pneg %p82
        %p298 = pneg %p106
        %p299 = pneg %p103
        %p300 = pneg %p127
        %p301 = pneg %p124
        %p302 = pneg %p148
        %p303 = pneg %p145
        %p304 = pneg %p169
        %p305 = pneg %p166
        %p306 = pneg %p195
        %p307 = pneg %p192
        %s308 = smul.u32 4, %s22
        %p309 = scmp.lt.s32.totalorder %s308, 7
        %s310 = scalar_select %p309, %s308, 7
        %s311 = smul.addr %s310, 8
        %s312 = scalar_lea.vmem %s7, %s311
        %s313 = smul.u32 4, %s22
        %s314 = smul.u32 4, %s22
        %p315 = scmp.lt.s32.totalorder %s314, 7
        %s316 = scalar_select %p315, %s314, 7
        %s317 = smul.addr %s316, 8
        %s318 = scalar_lea.vmem %s7, %s317
        %s319 = smul.u32 4, %s22
        %v320 = vld [vmem:[%s276] sm:$0xff]
        %v321 = vld [vmem:[%s276 + $0x8] sm:$0xff]
        %v322 = vld [vmem:[%s276 + $0x10] sm:$0xff]
        %v323 = vld [vmem:[%s276 + $0x18] sm:$0xff]
        %v324 = vpack.c.bf16 %v321, %v320
        %v325 = vpack.c.bf16 %v323, %v322
        %v326 = vld [vmem:[%s1] sm:$0xff]
        %v327 = vld [vmem:[%s1 + $0x8] sm:$0xff]
        %v328 = vld [vmem:[%s1 + $0x10] sm:$0xff]
        %v329 = vld [vmem:[%s1 + $0x18] sm:$0xff]
        %v330 = vld [vmem:[%s1 + $0x20] sm:$0xff]
        %v331 = vld [vmem:[%s1 + $0x28] sm:$0xff]
        %v332 = vld [vmem:[%s1 + $0x30] sm:$0xff]
        %v333 = vld [vmem:[%s1 + $0x38] sm:$0xff]
        %v334 = vld [vmem:[%s1 + $0x40] sm:$0xff]
        %v335 = vld [vmem:[%s1 + $0x48] sm:$0xff]
        %v336 = vld [vmem:[%s1 + $0x50] sm:$0xff]
        %v337 = vld [vmem:[%s1 + $0x58] sm:$0xff]
        %v338 = vld [vmem:[%s1 + $0x60] sm:$0xff]
        %v339 = vld [vmem:[%s1 + $0x68] sm:$0xff]
        %v340 = vld [vmem:[%s1 + $0x70] sm:$0xff]
        %v341 = vld [vmem:[%s1 + $0x78] sm:$0xff]
        %v342 = vld [vmem:[%s1 + $0x80] sm:$0xff]
        %v343 = vld [vmem:[%s1 + $0x88] sm:$0xff]
        %v344 = vld [vmem:[%s1 + $0x90] sm:$0xff]
        %v345 = vld [vmem:[%s1 + $0x98] sm:$0xff]
        %v346 = vld [vmem:[%s1 + $0xa0] sm:$0xff]
        %v347 = vld [vmem:[%s1 + $0xa8] sm:$0xff]
        %v348 = vld [vmem:[%s1 + $0xb0] sm:$0xff]
        %v349 = vld [vmem:[%s1 + $0xb8] sm:$0xff]
        %v350 = vld [vmem:[%s1 + $0xc0] sm:$0xff]
        %v351 = vld [vmem:[%s1 + $0xc8] sm:$0xff]
        %v352 = vld [vmem:[%s1 + $0xd0] sm:$0xff]
        %v353 = vld [vmem:[%s1 + $0xd8] sm:$0xff]
        %v354 = vld [vmem:[%s1 + $0xe0] sm:$0xff]
        %v355 = vld [vmem:[%s1 + $0xe8] sm:$0xff]
        %v356 = vld [vmem:[%s1 + $0xf0] sm:$0xff]
        %v357 = vld [vmem:[%s1 + $0xf8] sm:$0xff]
        %v358 = vld [vmem:[%s2] sm:$0xf]
        %v360 = vperm.slane %v358, 0
        %v361 = vperm.slane %v358, 1
        %v362 = vperm.slane %v358, 2
        %v363 = vperm.slane %v358, 3
        %v400 = vunpack.c.l.b16 %v326
        %v401 = vunpack.c.h.b16 %v326
        %v402 = vunpack.c.l.b16 %v327
        %v403 = vunpack.c.h.b16 %v327
        %v404 = vunpack.c.l.b16 %v328
        %v405 = vunpack.c.h.b16 %v328
        %v406 = vunpack.c.l.b16 %v329
        %v407 = vunpack.c.h.b16 %v329
        %v408 = vunpack.c.l.b16 %v330
        %v409 = vunpack.c.h.b16 %v330
        %v410 = vunpack.c.l.b16 %v331
        %v411 = vunpack.c.h.b16 %v331
        %v412 = vunpack.c.l.b16 %v332
        %v413 = vunpack.c.h.b16 %v332
        %v414 = vunpack.c.l.b16 %v333
        %v415 = vunpack.c.h.b16 %v333
        %v416 = vunpack.c.l.b16 %v334
        %v417 = vunpack.c.h.b16 %v334
        %v418 = vunpack.c.l.b16 %v335
        %v419 = vunpack.c.h.b16 %v335
        %v420 = vunpack.c.l.b16 %v336
        %v421 = vunpack.c.h.b16 %v336
        %v422 = vunpack.c.l.b16 %v337
        %v423 = vunpack.c.h.b16 %v337
        %v424 = vunpack.c.l.b16 %v338
        %v425 = vunpack.c.h.b16 %v338
        %v426 = vunpack.c.l.b16 %v339
        %v427 = vunpack.c.h.b16 %v339
        %v428 = vunpack.c.l.b16 %v340
        %v429 = vunpack.c.h.b16 %v340
        %v430 = vunpack.c.l.b16 %v341
        %v431 = vunpack.c.h.b16 %v341
        %v432 = vunpack.c.l.b16 %v342
        %v433 = vunpack.c.h.b16 %v342
        %v434 = vunpack.c.l.b16 %v343
        %v435 = vunpack.c.h.b16 %v343
        %v436 = vunpack.c.l.b16 %v344
        %v437 = vunpack.c.h.b16 %v344
        %v438 = vunpack.c.l.b16 %v345
        %v439 = vunpack.c.h.b16 %v345
        %v440 = vunpack.c.l.b16 %v346
        %v441 = vunpack.c.h.b16 %v346
        %v442 = vunpack.c.l.b16 %v347
        %v443 = vunpack.c.h.b16 %v347
        %v444 = vunpack.c.l.b16 %v348
        %v445 = vunpack.c.h.b16 %v348
        %v446 = vunpack.c.l.b16 %v349
        %v447 = vunpack.c.h.b16 %v349
        %v448 = vunpack.c.l.b16 %v350
        %v449 = vunpack.c.h.b16 %v350
        %v450 = vunpack.c.l.b16 %v351
        %v451 = vunpack.c.h.b16 %v351
        %v452 = vunpack.c.l.b16 %v352
        %v453 = vunpack.c.h.b16 %v352
        %v454 = vunpack.c.l.b16 %v353
        %v455 = vunpack.c.h.b16 %v353
        %v456 = vunpack.c.l.b16 %v354
        %v457 = vunpack.c.h.b16 %v354
        %v458 = vunpack.c.l.b16 %v355
        %v459 = vunpack.c.h.b16 %v355
        %v460 = vunpack.c.l.b16 %v356
        %v461 = vunpack.c.h.b16 %v356
        %v462 = vunpack.c.l.b16 %v357
        %v463 = vunpack.c.h.b16 %v357
        %v464 = vpack.c.b16 %v404, %v400
        %v465 = vpack.c.b16 %v405, %v401
        %v466 = vpack.c.b16 %v406, %v402
        %v467 = vpack.c.b16 %v407, %v403
        %v468 = vpack.c.b16 %v412, %v408
        %v469 = vpack.c.b16 %v413, %v409
        %v470 = vpack.c.b16 %v414, %v410
        %v471 = vpack.c.b16 %v415, %v411
        %v472 = vpack.c.b16 %v420, %v416
        %v473 = vpack.c.b16 %v421, %v417
        %v474 = vpack.c.b16 %v422, %v418
        %v475 = vpack.c.b16 %v423, %v419
        %v476 = vpack.c.b16 %v428, %v424
        %v477 = vpack.c.b16 %v429, %v425
        %v478 = vpack.c.b16 %v430, %v426
        %v479 = vpack.c.b16 %v431, %v427
        %v480 = vpack.c.b16 %v436, %v432
        %v481 = vpack.c.b16 %v437, %v433
        %v482 = vpack.c.b16 %v438, %v434
        %v483 = vpack.c.b16 %v439, %v435
        %v484 = vpack.c.b16 %v444, %v440
        %v485 = vpack.c.b16 %v445, %v441
        %v486 = vpack.c.b16 %v446, %v442
        %v487 = vpack.c.b16 %v447, %v443
        %v488 = vpack.c.b16 %v452, %v448
        %v489 = vpack.c.b16 %v453, %v449
        %v490 = vpack.c.b16 %v454, %v450
        %v491 = vpack.c.b16 %v455, %v451
        %v492 = vpack.c.b16 %v460, %v456
        %v493 = vpack.c.b16 %v461, %v457
        %v494 = vpack.c.b16 %v462, %v458
        %v495 = vpack.c.b16 %v463, %v459
        %528 = vmatpush.bf16.msra.mxu0 %v492
        %529 = vmatpush.bf16.msra.mxu0 %v488
        %530 = vmatpush.bf16.msra.mxu0 %v484
        %531 = vmatpush.bf16.msra.mxu0 %v480
        %532 = vmatpush.bf16.msra.mxu0 %v476
        %533 = vmatpush.bf16.msra.mxu0 %v472
        %534 = vmatpush.bf16.msra.mxu0 %v468
        %535 = vmatpush.bf16.msra.mxu0 %v464
        %536 = vmatmul.bf16.gmra.mxu0 %v324
        %v537 = vpop.f32.mrf.mxu0
        %v538 = vadd.f32 %v360, %v537
        %v539 = vpop.f32.mrf.mxu0
        %v540 = vadd.f32 %v360, %v539
        %541 = vmatmul.bf16.gmra.mxu0 %v325
        %v542 = vpop.f32.mrf.mxu0
        %v543 = vadd.f32 %v360, %v542
        %v544 = vpop.f32.mrf.mxu0
        %v545 = vadd.f32 %v360, %v544
        %546 = vdwg.mxu0
        %547 = vmatpush.bf16.msra.mxu0 %v493
        %548 = vmatpush.bf16.msra.mxu0 %v489
        %549 = vmatpush.bf16.msra.mxu0 %v485
        %550 = vmatpush.bf16.msra.mxu0 %v481
        %551 = vmatpush.bf16.msra.mxu0 %v477
        %552 = vmatpush.bf16.msra.mxu0 %v473
        %553 = vmatpush.bf16.msra.mxu0 %v469
        %554 = vmatpush.bf16.msra.mxu0 %v465
        %555 = vmatmul.bf16.gmra.mxu0 %v324
        %v556 = vpop.f32.mrf.mxu0
        %v557 = vadd.f32 %v361, %v556
        %v558 = vpop.f32.mrf.mxu0
        %v559 = vadd.f32 %v361, %v558
        %560 = vmatmul.bf16.gmra.mxu0 %v325
        %v561 = vpop.f32.mrf.mxu0
        %v562 = vadd.f32 %v361, %v561
        %v563 = vpop.f32.mrf.mxu0
        %v564 = vadd.f32 %v361, %v563
        %565 = vdwg.mxu0
        %566 = vmatpush.bf16.msra.mxu0 %v494
        %567 = vmatpush.bf16.msra.mxu0 %v490
        %568 = vmatpush.bf16.msra.mxu0 %v486
        %569 = vmatpush.bf16.msra.mxu0 %v482
        %570 = vmatpush.bf16.msra.mxu0 %v478
        %571 = vmatpush.bf16.msra.mxu0 %v474
        %572 = vmatpush.bf16.msra.mxu0 %v470
        %573 = vmatpush.bf16.msra.mxu0 %v466
        %574 = vmatmul.bf16.gmra.mxu0 %v324
        %v575 = vpop.f32.mrf.mxu0
        %v576 = vadd.f32 %v362, %v575
        %v577 = vpop.f32.mrf.mxu0
        %v578 = vadd.f32 %v362, %v577
        %579 = vmatmul.bf16.gmra.mxu0 %v325
        %v580 = vpop.f32.mrf.mxu0
        %v581 = vadd.f32 %v362, %v580
        %v582 = vpop.f32.mrf.mxu0
        %v583 = vadd.f32 %v362, %v582
        %584 = vdwg.mxu0
        %585 = vmatpush.bf16.msra.mxu0 %v495
        %586 = vmatpush.bf16.msra.mxu0 %v491
        %587 = vmatpush.bf16.msra.mxu0 %v487
        %588 = vmatpush.bf16.msra.mxu0 %v483
        %589 = vmatpush.bf16.msra.mxu0 %v479
        %590 = vmatpush.bf16.msra.mxu0 %v475
        %591 = vmatpush.bf16.msra.mxu0 %v471
        %592 = vmatpush.bf16.msra.mxu0 %v467
        %593 = vmatmul.bf16.gmra.mxu0 %v324
        %v594 = vpop.f32.mrf.mxu0
        %v595 = vadd.f32 %v363, %v594
        %v596 = vpop.f32.mrf.mxu0
        %v597 = vadd.f32 %v363, %v596
        %598 = vmatmul.bf16.gmra.mxu0 %v325
        %v599 = vpop.f32.mrf.mxu0
        %v600 = vadd.f32 %v363, %v599
        %v601 = vpop.f32.mrf.mxu0
        %v602 = vadd.f32 %v363, %v601
        %603 = vdwg.mxu0
        %v604 = vmax.f32 %v538, 0.0
        %v605 = vmax.f32 %v557, 0.0
        %v606 = vmax.f32 %v576, 0.0
        %v607 = vmax.f32 %v595, 0.0
        %v608 = vmax.f32 %v540, 0.0
        %v609 = vmax.f32 %v559, 0.0
        %v610 = vmax.f32 %v578, 0.0
        %v611 = vmax.f32 %v597, 0.0
        %v612 = vmax.f32 %v543, 0.0
        %v613 = vmax.f32 %v562, 0.0
        %v614 = vmax.f32 %v581, 0.0
        %v615 = vmax.f32 %v600, 0.0
        %v616 = vmax.f32 %v545, 0.0
        %v617 = vmax.f32 %v564, 0.0
        %v618 = vmax.f32 %v583, 0.0
        %v619 = vmax.f32 %v602, 0.0
        %v620 = vpack.c.bf16 %v608, %v604
        %v621 = vpack.c.bf16 %v609, %v605
        %v622 = vpack.c.bf16 %v610, %v606
        %v623 = vpack.c.bf16 %v611, %v607
        %v624 = vpack.c.bf16 %v616, %v612
        %v625 = vpack.c.bf16 %v617, %v613
        %v626 = vpack.c.bf16 %v618, %v614
        %v627 = vpack.c.bf16 %v619, %v615
        %v628 = vld [vmem:[#allocation4] sm:$0xff]
        %v629 = vld [vmem:[#allocation4 + $0x8] sm:$0xff]
        %v630 = vld [vmem:[#allocation4 + $0x10] sm:$0xff]
        %v631 = vld [vmem:[#allocation4 + $0x18] sm:$0xff]
        %v632 = vld [vmem:[#allocation4 + $0x20] sm:$0xff]
        %v633 = vld [vmem:[#allocation4 + $0x28] sm:$0xff]
        %v634 = vld [vmem:[#allocation4 + $0x30] sm:$0xff]
        %v635 = vld [vmem:[#allocation4 + $0x38] sm:$0xff]
        %v636 = vld [vmem:[#allocation4 + $0x40] sm:$0xff]
        %v637 = vld [vmem:[#allocation4 + $0x48] sm:$0xff]
        %v638 = vld [vmem:[#allocation4 + $0x50] sm:$0xff]
        %v639 = vld [vmem:[#allocation4 + $0x58] sm:$0xff]
        %v640 = vld [vmem:[#allocation4 + $0x60] sm:$0xff]
        %v641 = vld [vmem:[#allocation4 + $0x68] sm:$0xff]
        %v642 = vld [vmem:[#allocation4 + $0x70] sm:$0xff]
        %v643 = vld [vmem:[#allocation4 + $0x78] sm:$0xff]
        %v644 = vld [vmem:[#allocation4 + $0x80] sm:$0xff]
        %v645 = vld [vmem:[#allocation4 + $0x88] sm:$0xff]
        %v646 = vld [vmem:[#allocation4 + $0x90] sm:$0xff]
        %v647 = vld [vmem:[#allocation4 + $0x98] sm:$0xff]
        %v648 = vld [vmem:[#allocation4 + $0xa0] sm:$0xff]
        %v649 = vld [vmem:[#allocation4 + $0xa8] sm:$0xff]
        %v650 = vld [vmem:[#allocation4 + $0xb0] sm:$0xff]
        %v651 = vld [vmem:[#allocation4 + $0xb8] sm:$0xff]
        %v652 = vld [vmem:[#allocation4 + $0xc0] sm:$0xff]
        %v653 = vld [vmem:[#allocation4 + $0xc8] sm:$0xff]
        %v654 = vld [vmem:[#allocation4 + $0xd0] sm:$0xff]
        %v655 = vld [vmem:[#allocation4 + $0xd8] sm:$0xff]
        %v656 = vld [vmem:[#allocation4 + $0xe0] sm:$0xff]
        %v657 = vld [vmem:[#allocation4 + $0xe8] sm:$0xff]
        %v658 = vld [vmem:[#allocation4 + $0xf0] sm:$0xff]
        %v659 = vld [vmem:[#allocation4 + $0xf8] sm:$0xff]
        %v660 = vld [vmem:[#allocation4 + $0x100] sm:$0xff]
        %v661 = vld [vmem:[#allocation4 + $0x108] sm:$0xff]
        %v662 = vld [vmem:[#allocation4 + $0x110] sm:$0xff]
        %v663 = vld [vmem:[#allocation4 + $0x118] sm:$0xff]
        %v664 = vld [vmem:[#allocation4 + $0x120] sm:$0xff]
        %v665 = vld [vmem:[#allocation4 + $0x128] sm:$0xff]
        %v666 = vld [vmem:[#allocation4 + $0x130] sm:$0xff]
        %v667 = vld [vmem:[#allocation4 + $0x138] sm:$0xff]
        %v668 = vld [vmem:[#allocation4 + $0x140] sm:$0xff]
        %v669 = vld [vmem:[#allocation4 + $0x148] sm:$0xff]
        %v670 = vld [vmem:[#allocation4 + $0x150] sm:$0xff]
        %v671 = vld [vmem:[#allocation4 + $0x158] sm:$0xff]
        %v672 = vld [vmem:[#allocation4 + $0x160] sm:$0xff]
        %v673 = vld [vmem:[#allocation4 + $0x168] sm:$0xff]
        %v674 = vld [vmem:[#allocation4 + $0x170] sm:$0xff]
        %v675 = vld [vmem:[#allocation4 + $0x178] sm:$0xff]
        %v676 = vld [vmem:[#allocation4 + $0x180] sm:$0xff]
        %v677 = vld [vmem:[#allocation4 + $0x188] sm:$0xff]
        %v678 = vld [vmem:[#allocation4 + $0x190] sm:$0xff]
        %v679 = vld [vmem:[#allocation4 + $0x198] sm:$0xff]
        %v680 = vld [vmem:[#allocation4 + $0x1a0] sm:$0xff]
        %v681 = vld [vmem:[#allocation4 + $0x1a8] sm:$0xff]
        %v682 = vld [vmem:[#allocation4 + $0x1b0] sm:$0xff]
        %v683 = vld [vmem:[#allocation4 + $0x1b8] sm:$0xff]
        %v684 = vld [vmem:[#allocation4 + $0x1c0] sm:$0xff]
        %v685 = vld [vmem:[#allocation4 + $0x1c8] sm:$0xff]
        %v686 = vld [vmem:[#allocation4 + $0x1d0] sm:$0xff]
        %v687 = vld [vmem:[#allocation4 + $0x1d8] sm:$0xff]
        %v688 = vld [vmem:[#allocation4 + $0x1e0] sm:$0xff]
        %v689 = vld [vmem:[#allocation4 + $0x1e8] sm:$0xff]
        %v690 = vld [vmem:[#allocation4 + $0x1f0] sm:$0xff]
        %v691 = vld [vmem:[#allocation4 + $0x1f8] sm:$0xff]
        %v692 = vld [vmem:[#allocation4 + $0x200] sm:$0xff]
        %v693 = vld [vmem:[#allocation4 + $0x208] sm:$0xff]
        %v694 = vld [vmem:[#allocation4 + $0x210] sm:$0xff]
        %v695 = vld [vmem:[#allocation4 + $0x218] sm:$0xff]
        %v696 = vld [vmem:[#allocation4 + $0x220] sm:$0xff]
        %v697 = vld [vmem:[#allocation4 + $0x228] sm:$0xff]
        %v698 = vld [vmem:[#allocation4 + $0x230] sm:$0xff]
        %v699 = vld [vmem:[#allocation4 + $0x238] sm:$0xff]
        %v700 = vld [vmem:[#allocation4 + $0x240] sm:$0xff]
        %v701 = vld [vmem:[#allocation4 + $0x248] sm:$0xff]
        %v702 = vld [vmem:[#allocation4 + $0x250] sm:$0xff]
        %v703 = vld [vmem:[#allocation4 + $0x258] sm:$0xff]
        %v704 = vld [vmem:[#allocation4 + $0x260] sm:$0xff]
        %v705 = vld [vmem:[#allocation4 + $0x268] sm:$0xff]
        %v706 = vld [vmem:[#allocation4 + $0x270] sm:$0xff]
        %v707 = vld [vmem:[#allocation4 + $0x278] sm:$0xff]
        %v708 = vld [vmem:[#allocation4 + $0x280] sm:$0xff]
        %v709 = vld [vmem:[#allocation4 + $0x288] sm:$0xff]
        %v710 = vld [vmem:[#allocation4 + $0x290] sm:$0xff]
        %v711 = vld [vmem:[#allocation4 + $0x298] sm:$0xff]
        %v712 = vld [vmem:[#allocation4 + $0x2a0] sm:$0xff]
        %v713 = vld [vmem:[#allocation4 + $0x2a8] sm:$0xff]
        %v714 = vld [vmem:[#allocation4 + $0x2b0] sm:$0xff]
        %v715 = vld [vmem:[#allocation4 + $0x2b8] sm:$0xff]
        %v716 = vld [vmem:[#allocation4 + $0x2c0] sm:$0xff]
        %v717 = vld [vmem:[#allocation4 + $0x2c8] sm:$0xff]
        %v718 = vld [vmem:[#allocation4 + $0x2d0] sm:$0xff]
        %v719 = vld [vmem:[#allocation4 + $0x2d8] sm:$0xff]
        %v720 = vld [vmem:[#allocation4 + $0x2e0] sm:$0xff]
        %v721 = vld [vmem:[#allocation4 + $0x2e8] sm:$0xff]
        %v722 = vld [vmem:[#allocation4 + $0x2f0] sm:$0xff]
        %v723 = vld [vmem:[#allocation4 + $0x2f8] sm:$0xff]
        %v724 = vld [vmem:[#allocation4 + $0x300] sm:$0xff]
        %v725 = vld [vmem:[#allocation4 + $0x308] sm:$0xff]
        %v726 = vld [vmem:[#allocation4 + $0x310] sm:$0xff]
        %v727 = vld [vmem:[#allocation4 + $0x318] sm:$0xff]
        %v728 = vld [vmem:[#allocation4 + $0x320] sm:$0xff]
        %v729 = vld [vmem:[#allocation4 + $0x328] sm:$0xff]
        %v730 = vld [vmem:[#allocation4 + $0x330] sm:$0xff]
        %v731 = vld [vmem:[#allocation4 + $0x338] sm:$0xff]
        %v732 = vld [vmem:[#allocation4 + $0x340] sm:$0xff]
        %v733 = vld [vmem:[#allocation4 + $0x348] sm:$0xff]
        %v734 = vld [vmem:[#allocation4 + $0x350] sm:$0xff]
        %v735 = vld [vmem:[#allocation4 + $0x358] sm:$0xff]
        %v736 = vld [vmem:[#allocation4 + $0x360] sm:$0xff]
        %v737 = vld [vmem:[#allocation4 + $0x368] sm:$0xff]
        %v738 = vld [vmem:[#allocation4 + $0x370] sm:$0xff]
        %v739 = vld [vmem:[#allocation4 + $0x378] sm:$0xff]
        %v740 = vld [vmem:[#allocation4 + $0x380] sm:$0xff]
        %v741 = vld [vmem:[#allocation4 + $0x388] sm:$0xff]
        %v742 = vld [vmem:[#allocation4 + $0x390] sm:$0xff]
        %v743 = vld [vmem:[#allocation4 + $0x398] sm:$0xff]
        %v744 = vld [vmem:[#allocation4 + $0x3a0] sm:$0xff]
        %v745 = vld [vmem:[#allocation4 + $0x3a8] sm:$0xff]
        %v746 = vld [vmem:[#allocation4 + $0x3b0] sm:$0xff]
        %v747 = vld [vmem:[#allocation4 + $0x3b8] sm:$0xff]
        %v748 = vld [vmem:[#allocation4 + $0x3c0] sm:$0xff]
        %v749 = vld [vmem:[#allocation4 + $0x3c8] sm:$0xff]
        %v750 = vld [vmem:[#allocation4 + $0x3d0] sm:$0xff]
        %v751 = vld [vmem:[#allocation4 + $0x3d8] sm:$0xff]
        %v752 = vld [vmem:[#allocation4 + $0x3e0] sm:$0xff]
        %v753 = vld [vmem:[#allocation4 + $0x3e8] sm:$0xff]
        %v754 = vld [vmem:[#allocation4 + $0x3f0] sm:$0xff]
        %v755 = vld [vmem:[#allocation4 + $0x3f8] sm:$0xff]
        %v756 = vld [vmem:[%s4] sm:$0xf]
        %v758 = vperm.slane %v756, 0
        %v759 = vperm.slane %v756, 1
        %v760 = vperm.slane %v756, 2
        %v761 = vperm.slane %v756, 3
        %v894 = vunpack.c.l.b16 %v628
        %v895 = vunpack.c.h.b16 %v628
        %v896 = vunpack.c.l.b16 %v629
        %v897 = vunpack.c.h.b16 %v629
        %v898 = vunpack.c.l.b16 %v630
        %v899 = vunpack.c.h.b16 %v630
        %v900 = vunpack.c.l.b16 %v631
        %v901 = vunpack.c.h.b16 %v631
        %v902 = vunpack.c.l.b16 %v632
        %v903 = vunpack.c.h.b16 %v632
        %v904 = vunpack.c.l.b16 %v633
        %v905 = vunpack.c.h.b16 %v633
        %v906 = vunpack.c.l.b16 %v634
        %v907 = vunpack.c.h.b16 %v634
        %v908 = vunpack.c.l.b16 %v635
        %v909 = vunpack.c.h.b16 %v635
        %v910 = vunpack.c.l.b16 %v636
        %v911 = vunpack.c.h.b16 %v636
        %v912 = vunpack.c.l.b16 %v637
        %v913 = vunpack.c.h.b16 %v637
        %v914 = vunpack.c.l.b16 %v638
        %v915 = vunpack.c.h.b16 %v638
        %v916 = vunpack.c.l.b16 %v639
        %v917 = vunpack.c.h.b16 %v639
        %v918 = vunpack.c.l.b16 %v640
        %v919 = vunpack.c.h.b16 %v640
        %v920 = vunpack.c.l.b16 %v641
        %v921 = vunpack.c.h.b16 %v641
        %v922 = vunpack.c.l.b16 %v642
        %v923 = vunpack.c.h.b16 %v642
        %v924 = vunpack.c.l.b16 %v643
        %v925 = vunpack.c.h.b16 %v643
        %v926 = vunpack.c.l.b16 %v644
        %v927 = vunpack.c.h.b16 %v644
        %v928 = vunpack.c.l.b16 %v645
        %v929 = vunpack.c.h.b16 %v645
        %v930 = vunpack.c.l.b16 %v646
        %v931 = vunpack.c.h.b16 %v646
        %v932 = vunpack.c.l.b16 %v647
        %v933 = vunpack.c.h.b16 %v647
        %v934 = vunpack.c.l.b16 %v648
        %v935 = vunpack.c.h.b16 %v648
        %v936 = vunpack.c.l.b16 %v649
        %v937 = vunpack.c.h.b16 %v649
        %v938 = vunpack.c.l.b16 %v650
        %v939 = vunpack.c.h.b16 %v650
        %v940 = vunpack.c.l.b16 %v651
        %v941 = vunpack.c.h.b16 %v651
        %v942 = vunpack.c.l.b16 %v652
        %v943 = vunpack.c.h.b16 %v652
        %v944 = vunpack.c.l.b16 %v653
        %v945 = vunpack.c.h.b16 %v653
        %v946 = vunpack.c.l.b16 %v654
        %v947 = vunpack.c.h.b16 %v654
        %v948 = vunpack.c.l.b16 %v655
        %v949 = vunpack.c.h.b16 %v655
        %v950 = vunpack.c.l.b16 %v656
        %v951 = vunpack.c.h.b16 %v656
        %v952 = vunpack.c.l.b16 %v657
        %v953 = vunpack.c.h.b16 %v657
        %v954 = vunpack.c.l.b16 %v658
        %v955 = vunpack.c.h.b16 %v658
        %v956 = vunpack.c.l.b16 %v659
        %v957 = vunpack.c.h.b16 %v659
        %v958 = vunpack.c.l.b16 %v660
        %v959 = vunpack.c.h.b16 %v660
        %v960 = vunpack.c.l.b16 %v661
        %v961 = vunpack.c.h.b16 %v661
        %v962 = vunpack.c.l.b16 %v662
        %v963 = vunpack.c.h.b16 %v662
        %v964 = vunpack.c.l.b16 %v663
        %v965 = vunpack.c.h.b16 %v663
        %v966 = vunpack.c.l.b16 %v664
        %v967 = vunpack.c.h.b16 %v664
        %v968 = vunpack.c.l.b16 %v665
        %v969 = vunpack.c.h.b16 %v665
        %v970 = vunpack.c.l.b16 %v666
        %v971 = vunpack.c.h.b16 %v666
        %v972 = vunpack.c.l.b16 %v667
        %v973 = vunpack.c.h.b16 %v667
        %v974 = vunpack.c.l.b16 %v668
        %v975 = vunpack.c.h.b16 %v668
        %v976 = vunpack.c.l.b16 %v669
        %v977 = vunpack.c.h.b16 %v669
        %v978 = vunpack.c.l.b16 %v670
        %v979 = vunpack.c.h.b16 %v670
        %v980 = vunpack.c.l.b16 %v671
        %v981 = vunpack.c.h.b16 %v671
        %v982 = vunpack.c.l.b16 %v672
        %v983 = vunpack.c.h.b16 %v672
        %v984 = vunpack.c.l.b16 %v673
        %v985 = vunpack.c.h.b16 %v673
        %v986 = vunpack.c.l.b16 %v674
        %v987 = vunpack.c.h.b16 %v674
        %v988 = vunpack.c.l.b16 %v675
        %v989 = vunpack.c.h.b16 %v675
        %v990 = vunpack.c.l.b16 %v676
        %v991 = vunpack.c.h.b16 %v676
        %v992 = vunpack.c.l.b16 %v677
        %v993 = vunpack.c.h.b16 %v677
        %v994 = vunpack.c.l.b16 %v678
        %v995 = vunpack.c.h.b16 %v678
        %v996 = vunpack.c.l.b16 %v679
        %v997 = vunpack.c.h.b16 %v679
        %v998 = vunpack.c.l.b16 %v680
        %v999 = vunpack.c.h.b16 %v680
        %v1000 = vunpack.c.l.b16 %v681
        %v1001 = vunpack.c.h.b16 %v681
        %v1002 = vunpack.c.l.b16 %v682
        %v1003 = vunpack.c.h.b16 %v682
        %v1004 = vunpack.c.l.b16 %v683
        %v1005 = vunpack.c.h.b16 %v683
        %v1006 = vunpack.c.l.b16 %v684
        %v1007 = vunpack.c.h.b16 %v684
        %v1008 = vunpack.c.l.b16 %v685
        %v1009 = vunpack.c.h.b16 %v685
        %v1010 = vunpack.c.l.b16 %v686
        %v1011 = vunpack.c.h.b16 %v686
        %v1012 = vunpack.c.l.b16 %v687
        %v1013 = vunpack.c.h.b16 %v687
        %v1014 = vunpack.c.l.b16 %v688
        %v1015 = vunpack.c.h.b16 %v688
        %v1016 = vunpack.c.l.b16 %v689
        %v1017 = vunpack.c.h.b16 %v689
        %v1018 = vunpack.c.l.b16 %v690
        %v1019 = vunpack.c.h.b16 %v690
        %v1020 = vunpack.c.l.b16 %v691
        %v1021 = vunpack.c.h.b16 %v691
        %v1022 = vunpack.c.l.b16 %v692
        %v1023 = vunpack.c.h.b16 %v692
        %v1024 = vunpack.c.l.b16 %v693
        %v1025 = vunpack.c.h.b16 %v693
        %v1026 = vunpack.c.l.b16 %v694
        %v1027 = vunpack.c.h.b16 %v694
        %v1028 = vunpack.c.l.b16 %v695
        %v1029 = vunpack.c.h.b16 %v695
        %v1030 = vunpack.c.l.b16 %v696
        %v1031 = vunpack.c.h.b16 %v696
        %v1032 = vunpack.c.l.b16 %v697
        %v1033 = vunpack.c.h.b16 %v697
        %v1034 = vunpack.c.l.b16 %v698
        %v1035 = vunpack.c.h.b16 %v698
        %v1036 = vunpack.c.l.b16 %v699
        %v1037 = vunpack.c.h.b16 %v699
        %v1038 = vunpack.c.l.b16 %v700
        %v1039 = vunpack.c.h.b16 %v700
        %v1040 = vunpack.c.l.b16 %v701
        %v1041 = vunpack.c.h.b16 %v701
        %v1042 = vunpack.c.l.b16 %v702
        %v1043 = vunpack.c.h.b16 %v702
        %v1044 = vunpack.c.l.b16 %v703
        %v1045 = vunpack.c.h.b16 %v703
        %v1046 = vunpack.c.l.b16 %v704
        %v1047 = vunpack.c.h.b16 %v704
        %v1048 = vunpack.c.l.b16 %v705
        %v1049 = vunpack.c.h.b16 %v705
        %v1050 = vunpack.c.l.b16 %v706
        %v1051 = vunpack.c.h.b16 %v706
        %v1052 = vunpack.c.l.b16 %v707
        %v1053 = vunpack.c.h.b16 %v707
        %v1054 = vunpack.c.l.b16 %v708
        %v1055 = vunpack.c.h.b16 %v708
        %v1056 = vunpack.c.l.b16 %v709
        %v1057 = vunpack.c.h.b16 %v709
        %v1058 = vunpack.c.l.b16 %v710
        %v1059 = vunpack.c.h.b16 %v710
        %v1060 = vunpack.c.l.b16 %v711
        %v1061 = vunpack.c.h.b16 %v711
        %v1062 = vunpack.c.l.b16 %v712
        %v1063 = vunpack.c.h.b16 %v712
        %v1064 = vunpack.c.l.b16 %v713
        %v1065 = vunpack.c.h.b16 %v713
        %v1066 = vunpack.c.l.b16 %v714
        %v1067 = vunpack.c.h.b16 %v714
        %v1068 = vunpack.c.l.b16 %v715
        %v1069 = vunpack.c.h.b16 %v715
        %v1070 = vunpack.c.l.b16 %v716
        %v1071 = vunpack.c.h.b16 %v716
        %v1072 = vunpack.c.l.b16 %v717
        %v1073 = vunpack.c.h.b16 %v717
        %v1074 = vunpack.c.l.b16 %v718
        %v1075 = vunpack.c.h.b16 %v718
        %v1076 = vunpack.c.l.b16 %v719
        %v1077 = vunpack.c.h.b16 %v719
        %v1078 = vunpack.c.l.b16 %v720
        %v1079 = vunpack.c.h.b16 %v720
        %v1080 = vunpack.c.l.b16 %v721
        %v1081 = vunpack.c.h.b16 %v721
        %v1082 = vunpack.c.l.b16 %v722
        %v1083 = vunpack.c.h.b16 %v722
        %v1084 = vunpack.c.l.b16 %v723
        %v1085 = vunpack.c.h.b16 %v723
        %v1086 = vunpack.c.l.b16 %v724
        %v1087 = vunpack.c.h.b16 %v724
        %v1088 = vunpack.c.l.b16 %v725
        %v1089 = vunpack.c.h.b16 %v725
        %v1090 = vunpack.c.l.b16 %v726
        %v1091 = vunpack.c.h.b16 %v726
        %v1092 = vunpack.c.l.b16 %v727
        %v1093 = vunpack.c.h.b16 %v727
        %v1094 = vunpack.c.l.b16 %v728
        %v1095 = vunpack.c.h.b16 %v728
        %v1096 = vunpack.c.l.b16 %v729
        %v1097 = vunpack.c.h.b16 %v729
        %v1098 = vunpack.c.l.b16 %v730
        %v1099 = vunpack.c.h.b16 %v730
        %v1100 = vunpack.c.l.b16 %v731
        %v1101 = vunpack.c.h.b16 %v731
        %v1102 = vunpack.c.l.b16 %v732
        %v1103 = vunpack.c.h.b16 %v732
        %v1104 = vunpack.c.l.b16 %v733
        %v1105 = vunpack.c.h.b16 %v733
        %v1106 = vunpack.c.l.b16 %v734
        %v1107 = vunpack.c.h.b16 %v734
        %v1108 = vunpack.c.l.b16 %v735
        %v1109 = vunpack.c.h.b16 %v735
        %v1110 = vunpack.c.l.b16 %v736
        %v1111 = vunpack.c.h.b16 %v736
        %v1112 = vunpack.c.l.b16 %v737
        %v1113 = vunpack.c.h.b16 %v737
        %v1114 = vunpack.c.l.b16 %v738
        %v1115 = vunpack.c.h.b16 %v738
        %v1116 = vunpack.c.l.b16 %v739
        %v1117 = vunpack.c.h.b16 %v739
        %v1118 = vunpack.c.l.b16 %v740
        %v1119 = vunpack.c.h.b16 %v740
        %v1120 = vunpack.c.l.b16 %v741
        %v1121 = vunpack.c.h.b16 %v741
        %v1122 = vunpack.c.l.b16 %v742
        %v1123 = vunpack.c.h.b16 %v742
        %v1124 = vunpack.c.l.b16 %v743
        %v1125 = vunpack.c.h.b16 %v743
        %v1126 = vunpack.c.l.b16 %v744
        %v1127 = vunpack.c.h.b16 %v744
        %v1128 = vunpack.c.l.b16 %v745
        %v1129 = vunpack.c.h.b16 %v745
        %v1130 = vunpack.c.l.b16 %v746
        %v1131 = vunpack.c.h.b16 %v746
        %v1132 = vunpack.c.l.b16 %v747
        %v1133 = vunpack.c.h.b16 %v747
        %v1134 = vunpack.c.l.b16 %v748
        %v1135 = vunpack.c.h.b16 %v748
        %v1136 = vunpack.c.l.b16 %v749
        %v1137 = vunpack.c.h.b16 %v749
        %v1138 = vunpack.c.l.b16 %v750
        %v1139 = vunpack.c.h.b16 %v750
        %v1140 = vunpack.c.l.b16 %v751
        %v1141 = vunpack.c.h.b16 %v751
        %v1142 = vunpack.c.l.b16 %v752
        %v1143 = vunpack.c.h.b16 %v752
        %v1144 = vunpack.c.l.b16 %v753
        %v1145 = vunpack.c.h.b16 %v753
        %v1146 = vunpack.c.l.b16 %v754
        %v1147 = vunpack.c.h.b16 %v754
        %v1148 = vunpack.c.l.b16 %v755
        %v1149 = vunpack.c.h.b16 %v755
        %v1150 = vpack.c.b16 %v898, %v894
        %v1151 = vpack.c.b16 %v899, %v895
        %v1152 = vpack.c.b16 %v900, %v896
        %v1153 = vpack.c.b16 %v901, %v897
        %v1154 = vpack.c.b16 %v906, %v902
        %v1155 = vpack.c.b16 %v907, %v903
        %v1156 = vpack.c.b16 %v908, %v904
        %v1157 = vpack.c.b16 %v909, %v905
        %v1158 = vpack.c.b16 %v914, %v910
        %v1159 = vpack.c.b16 %v915, %v911
        %v1160 = vpack.c.b16 %v916, %v912
        %v1161 = vpack.c.b16 %v917, %v913
        %v1162 = vpack.c.b16 %v922, %v918
        %v1163 = vpack.c.b16 %v923, %v919
        %v1164 = vpack.c.b16 %v924, %v920
        %v1165 = vpack.c.b16 %v925, %v921
        %v1166 = vpack.c.b16 %v930, %v926
        %v1167 = vpack.c.b16 %v931, %v927
        %v1168 = vpack.c.b16 %v932, %v928
        %v1169 = vpack.c.b16 %v933, %v929
        %v1170 = vpack.c.b16 %v938, %v934
        %v1171 = vpack.c.b16 %v939, %v935
        %v1172 = vpack.c.b16 %v940, %v936
        %v1173 = vpack.c.b16 %v941, %v937
        %v1174 = vpack.c.b16 %v946, %v942
        %v1175 = vpack.c.b16 %v947, %v943
        %v1176 = vpack.c.b16 %v948, %v944
        %v1177 = vpack.c.b16 %v949, %v945
        %v1178 = vpack.c.b16 %v954, %v950
        %v1179 = vpack.c.b16 %v955, %v951
        %v1180 = vpack.c.b16 %v956, %v952
        %v1181 = vpack.c.b16 %v957, %v953
        %v1182 = vpack.c.b16 %v962, %v958
        %v1183 = vpack.c.b16 %v963, %v959
        %v1184 = vpack.c.b16 %v964, %v960
        %v1185 = vpack.c.b16 %v965, %v961
        %v1186 = vpack.c.b16 %v970, %v966
        %v1187 = vpack.c.b16 %v971, %v967
        %v1188 = vpack.c.b16 %v972, %v968
        %v1189 = vpack.c.b16 %v973, %v969
        %v1190 = vpack.c.b16 %v978, %v974
        %v1191 = vpack.c.b16 %v979, %v975
        %v1192 = vpack.c.b16 %v980, %v976
        %v1193 = vpack.c.b16 %v981, %v977
        %v1194 = vpack.c.b16 %v986, %v982
        %v1195 = vpack.c.b16 %v987, %v983
        %v1196 = vpack.c.b16 %v988, %v984
        %v1197 = vpack.c.b16 %v989, %v985
        %v1198 = vpack.c.b16 %v994, %v990
        %v1199 = vpack.c.b16 %v995, %v991
        %v1200 = vpack.c.b16 %v996, %v992
        %v1201 = vpack.c.b16 %v997, %v993
        %v1202 = vpack.c.b16 %v1002, %v998
        %v1203 = vpack.c.b16 %v1003, %v999
        %v1204 = vpack.c.b16 %v1004, %v1000
        %v1205 = vpack.c.b16 %v1005, %v1001
        %v1206 = vpack.c.b16 %v1010, %v1006
        %v1207 = vpack.c.b16 %v1011, %v1007
        %v1208 = vpack.c.b16 %v1012, %v1008
        %v1209 = vpack.c.b16 %v1013, %v1009
        %v1210 = vpack.c.b16 %v1018, %v1014
        %v1211 = vpack.c.b16 %v1019, %v1015
        %v1212 = vpack.c.b16 %v1020, %v1016
        %v1213 = vpack.c.b16 %v1021, %v1017
        %v1214 = vpack.c.b16 %v1026, %v1022
        %v1215 = vpack.c.b16 %v1027, %v1023
        %v1216 = vpack.c.b16 %v1028, %v1024
        %v1217 = vpack.c.b16 %v1029, %v1025
        %v1218 = vpack.c.b16 %v1034, %v1030
        %v1219 = vpack.c.b16 %v1035, %v1031
        %v1220 = vpack.c.b16 %v1036, %v1032
        %v1221 = vpack.c.b16 %v1037, %v1033
        %v1222 = vpack.c.b16 %v1042, %v1038
        %v1223 = vpack.c.b16 %v1043, %v1039
        %v1224 = vpack.c.b16 %v1044, %v1040
        %v1225 = vpack.c.b16 %v1045, %v1041
        %v1226 = vpack.c.b16 %v1050, %v1046
        %v1227 = vpack.c.b16 %v1051, %v1047
        %v1228 = vpack.c.b16 %v1052, %v1048
        %v1229 = vpack.c.b16 %v1053, %v1049
        %v1230 = vpack.c.b16 %v1058, %v1054
        %v1231 = vpack.c.b16 %v1059, %v1055
        %v1232 = vpack.c.b16 %v1060, %v1056
        %v1233 = vpack.c.b16 %v1061, %v1057
        %v1234 = vpack.c.b16 %v1066, %v1062
        %v1235 = vpack.c.b16 %v1067, %v1063
        %v1236 = vpack.c.b16 %v1068, %v1064
        %v1237 = vpack.c.b16 %v1069, %v1065
        %v1238 = vpack.c.b16 %v1074, %v1070
        %v1239 = vpack.c.b16 %v1075, %v1071
        %v1240 = vpack.c.b16 %v1076, %v1072
        %v1241 = vpack.c.b16 %v1077, %v1073
        %v1242 = vpack.c.b16 %v1082, %v1078
        %v1243 = vpack.c.b16 %v1083, %v1079
        %v1244 = vpack.c.b16 %v1084, %v1080
        %v1245 = vpack.c.b16 %v1085, %v1081
        %v1246 = vpack.c.b16 %v1090, %v1086
        %v1247 = vpack.c.b16 %v1091, %v1087
        %v1248 = vpack.c.b16 %v1092, %v1088
        %v1249 = vpack.c.b16 %v1093, %v1089
        %v1250 = vpack.c.b16 %v1098, %v1094
        %v1251 = vpack.c.b16 %v1099, %v1095
        %v1252 = vpack.c.b16 %v1100, %v1096
        %v1253 = vpack.c.b16 %v1101, %v1097
        %v1254 = vpack.c.b16 %v1106, %v1102
        %v1255 = vpack.c.b16 %v1107, %v1103
        %v1256 = vpack.c.b16 %v1108, %v1104
        %v1257 = vpack.c.b16 %v1109, %v1105
        %v1258 = vpack.c.b16 %v1114, %v1110
        %v1259 = vpack.c.b16 %v1115, %v1111
        %v1260 = vpack.c.b16 %v1116, %v1112
        %v1261 = vpack.c.b16 %v1117, %v1113
        %v1262 = vpack.c.b16 %v1122, %v1118
        %v1263 = vpack.c.b16 %v1123, %v1119
        %v1264 = vpack.c.b16 %v1124, %v1120
        %v1265 = vpack.c.b16 %v1125, %v1121
        %v1266 = vpack.c.b16 %v1130, %v1126
        %v1267 = vpack.c.b16 %v1131, %v1127
        %v1268 = vpack.c.b16 %v1132, %v1128
        %v1269 = vpack.c.b16 %v1133, %v1129
        %v1270 = vpack.c.b16 %v1138, %v1134
        %v1271 = vpack.c.b16 %v1139, %v1135
        %v1272 = vpack.c.b16 %v1140, %v1136
        %v1273 = vpack.c.b16 %v1141, %v1137
        %v1274 = vpack.c.b16 %v1146, %v1142
        %v1275 = vpack.c.b16 %v1147, %v1143
        %v1276 = vpack.c.b16 %v1148, %v1144
        %v1277 = vpack.c.b16 %v1149, %v1145
        %1406 = vmatpush.bf16.msra.mxu0 %v1178
        %1407 = vmatpush.bf16.msra.mxu0 %v1174
        %1408 = vmatpush.bf16.msra.mxu0 %v1170
        %1409 = vmatpush.bf16.msra.mxu0 %v1166
        %1410 = vmatpush.bf16.msra.mxu0 %v1162
        %1411 = vmatpush.bf16.msra.mxu0 %v1158
        %1412 = vmatpush.bf16.msra.mxu0 %v1154
        %1413 = vmatpush.bf16.msra.mxu0 %v1150
        %1414 = vmatmul.bf16.gmra.mxu0 %v620
        %v1415 = vpop.f32.mrf.mxu0
        %v1416 = vadd.f32 %v758, %v1415
        %v1417 = vpop.f32.mrf.mxu0
        %v1418 = vadd.f32 %v758, %v1417
        %1419 = vmatmul.bf16.gmra.mxu0 %v624
        %v1420 = vpop.f32.mrf.mxu0
        %v1421 = vadd.f32 %v758, %v1420
        %v1422 = vpop.f32.mrf.mxu0
        %v1423 = vadd.f32 %v758, %v1422
        %1424 = vdwg.mxu0
        %1425 = vmatpush.bf16.msra.mxu0 %v1210
        %1426 = vmatpush.bf16.msra.mxu0 %v1206
        %1427 = vmatpush.bf16.msra.mxu0 %v1202
        %1428 = vmatpush.bf16.msra.mxu0 %v1198
        %1429 = vmatpush.bf16.msra.mxu0 %v1194
        %1430 = vmatpush.bf16.msra.mxu0 %v1190
        %1431 = vmatpush.bf16.msra.mxu0 %v1186
        %1432 = vmatpush.bf16.msra.mxu0 %v1182
        %1433 = vmatmul.bf16.gmra.mxu0 %v621
        %v1434 = vpop.f32.mrf.mxu0
        %v1435 = vadd.f32 %v1416, %v1434
        %v1436 = vpop.f32.mrf.mxu0
        %v1437 = vadd.f32 %v1418, %v1436
        %1438 = vmatmul.bf16.gmra.mxu0 %v625
        %v1439 = vpop.f32.mrf.mxu0
        %v1440 = vadd.f32 %v1421, %v1439
        %v1441 = vpop.f32.mrf.mxu0
        %v1442 = vadd.f32 %v1423, %v1441
        %1443 = vdwg.mxu0
        %1444 = vmatpush.bf16.msra.mxu0 %v1242
        %1445 = vmatpush.bf16.msra.mxu0 %v1238
        %1446 = vmatpush.bf16.msra.mxu0 %v1234
        %1447 = vmatpush.bf16.msra.mxu0 %v1230
        %1448 = vmatpush.bf16.msra.mxu0 %v1226
        %1449 = vmatpush.bf16.msra.mxu0 %v1222
        %1450 = vmatpush.bf16.msra.mxu0 %v1218
        %1451 = vmatpush.bf16.msra.mxu0 %v1214
        %1452 = vmatmul.bf16.gmra.mxu0 %v622
        %v1453 = vpop.f32.mrf.mxu0
        %v1454 = vadd.f32 %v1435, %v1453
        %v1455 = vpop.f32.mrf.mxu0
        %v1456 = vadd.f32 %v1437, %v1455
        %1457 = vmatmul.bf16.gmra.mxu0 %v626
        %v1458 = vpop.f32.mrf.mxu0
        %v1459 = vadd.f32 %v1440, %v1458
        %v1460 = vpop.f32.mrf.mxu0
        %v1461 = vadd.f32 %v1442, %v1460
        %1462 = vdwg.mxu0
        %1463 = vmatpush.bf16.msra.mxu0 %v1274
        %1464 = vmatpush.bf16.msra.mxu0 %v1270
        %1465 = vmatpush.bf16.msra.mxu0 %v1266
        %1466 = vmatpush.bf16.msra.mxu0 %v1262
        %1467 = vmatpush.bf16.msra.mxu0 %v1258
        %1468 = vmatpush.bf16.msra.mxu0 %v1254
        %1469 = vmatpush.bf16.msra.mxu0 %v1250
        %1470 = vmatpush.bf16.msra.mxu0 %v1246
        %1471 = vmatmul.bf16.gmra.mxu0 %v623
        %v1472 = vpop.f32.mrf.mxu0
        %v1473 = vadd.f32 %v1454, %v1472
        %v1474 = vpop.f32.mrf.mxu0
        %v1475 = vadd.f32 %v1456, %v1474
        %1476 = vmatmul.bf16.gmra.mxu0 %v627
        %v1477 = vpop.f32.mrf.mxu0
        %v1478 = vadd.f32 %v1459, %v1477
        %v1479 = vpop.f32.mrf.mxu0
        %v1480 = vadd.f32 %v1461, %v1479
        %1481 = vdwg.mxu0
        %1482 = vmatpush.bf16.msra.mxu0 %v1179
        %1483 = vmatpush.bf16.msra.mxu0 %v1175
        %1484 = vmatpush.bf16.msra.mxu0 %v1171
        %1485 = vmatpush.bf16.msra.mxu0 %v1167
        %1486 = vmatpush.bf16.msra.mxu0 %v1163
        %1487 = vmatpush.bf16.msra.mxu0 %v1159
        %1488 = vmatpush.bf16.msra.mxu0 %v1155
        %1489 = vmatpush.bf16.msra.mxu0 %v1151
        %1490 = vmatmul.bf16.gmra.mxu0 %v620
        %v1491 = vpop.f32.mrf.mxu0
        %v1492 = vadd.f32 %v759, %v1491
        %v1493 = vpop.f32.mrf.mxu0
        %v1494 = vadd.f32 %v759, %v1493
        %1495 = vmatmul.bf16.gmra.mxu0 %v624
        %v1496 = vpop.f32.mrf.mxu0
        %v1497 = vadd.f32 %v759, %v1496
        %v1498 = vpop.f32.mrf.mxu0
        %v1499 = vadd.f32 %v759, %v1498
        %1500 = vdwg.mxu0
        %1501 = vmatpush.bf16.msra.mxu0 %v1211
        %1502 = vmatpush.bf16.msra.mxu0 %v1207
        %1503 = vmatpush.bf16.msra.mxu0 %v1203
        %1504 = vmatpush.bf16.msra.mxu0 %v1199
        %1505 = vmatpush.bf16.msra.mxu0 %v1195
        %1506 = vmatpush.bf16.msra.mxu0 %v1191
        %1507 = vmatpush.bf16.msra.mxu0 %v1187
        %1508 = vmatpush.bf16.msra.mxu0 %v1183
        %1509 = vmatmul.bf16.gmra.mxu0 %v621
        %v1510 = vpop.f32.mrf.mxu0
        %v1511 = vadd.f32 %v1492, %v1510
        %v1512 = vpop.f32.mrf.mxu0
        %v1513 = vadd.f32 %v1494, %v1512
        %1514 = vmatmul.bf16.gmra.mxu0 %v625
        %v1515 = vpop.f32.mrf.mxu0
        %v1516 = vadd.f32 %v1497, %v1515
        %v1517 = vpop.f32.mrf.mxu0
        %v1518 = vadd.f32 %v1499, %v1517
        %1519 = vdwg.mxu0
        %1520 = vmatpush.bf16.msra.mxu0 %v1243
        %1521 = vmatpush.bf16.msra.mxu0 %v1239
        %1522 = vmatpush.bf16.msra.mxu0 %v1235
        %1523 = vmatpush.bf16.msra.mxu0 %v1231
        %1524 = vmatpush.bf16.msra.mxu0 %v1227
        %1525 = vmatpush.bf16.msra.mxu0 %v1223
        %1526 = vmatpush.bf16.msra.mxu0 %v1219
        %1527 = vmatpush.bf16.msra.mxu0 %v1215
        %1528 = vmatmul.bf16.gmra.mxu0 %v622
        %v1529 = vpop.f32.mrf.mxu0
        %v1530 = vadd.f32 %v1511, %v1529
        %v1531 = vpop.f32.mrf.mxu0
        %v1532 = vadd.f32 %v1513, %v1531
        %1533 = vmatmul.bf16.gmra.mxu0 %v626
        %v1534 = vpop.f32.mrf.mxu0
        %v1535 = vadd.f32 %v1516, %v1534
        %v1536 = vpop.f32.mrf.mxu0
        %v1537 = vadd.f32 %v1518, %v1536
        %1538 = vdwg.mxu0
        %1539 = vmatpush.bf16.msra.mxu0 %v1275
        %1540 = vmatpush.bf16.msra.mxu0 %v1271
        %1541 = vmatpush.bf16.msra.mxu0 %v1267
        %1542 = vmatpush.bf16.msra.mxu0 %v1263
        %1543 = vmatpush.bf16.msra.mxu0 %v1259
        %1544 = vmatpush.bf16.msra.mxu0 %v1255
        %1545 = vmatpush.bf16.msra.mxu0 %v1251
        %1546 = vmatpush.bf16.msra.mxu0 %v1247
        %1547 = vmatmul.bf16.gmra.mxu0 %v623
        %v1548 = vpop.f32.mrf.mxu0
        %v1549 = vadd.f32 %v1530, %v1548
        %v1550 = vpop.f32.mrf.mxu0
        %v1551 = vadd.f32 %v1532, %v1550
        %1552 = vmatmul.bf16.gmra.mxu0 %v627
        %v1553 = vpop.f32.mrf.mxu0
        %v1554 = vadd.f32 %v1535, %v1553
        %v1555 = vpop.f32.mrf.mxu0
        %v1556 = vadd.f32 %v1537, %v1555
        %1557 = vdwg.mxu0
        %1558 = vmatpush.bf16.msra.mxu0 %v1180
        %1559 = vmatpush.bf16.msra.mxu0 %v1176
        %1560 = vmatpush.bf16.msra.mxu0 %v1172
        %1561 = vmatpush.bf16.msra.mxu0 %v1168
        %1562 = vmatpush.bf16.msra.mxu0 %v1164
        %1563 = vmatpush.bf16.msra.mxu0 %v1160
        %1564 = vmatpush.bf16.msra.mxu0 %v1156
        %1565 = vmatpush.bf16.msra.mxu0 %v1152
        %1566 = vmatmul.bf16.gmra.mxu0 %v620
        %v1567 = vpop.f32.mrf.mxu0
        %v1568 = vadd.f32 %v760, %v1567
        %v1569 = vpop.f32.mrf.mxu0
        %v1570 = vadd.f32 %v760, %v1569
        %1571 = vmatmul.bf16.gmra.mxu0 %v624
        %v1572 = vpop.f32.mrf.mxu0
        %v1573 = vadd.f32 %v760, %v1572
        %v1574 = vpop.f32.mrf.mxu0
        %v1575 = vadd.f32 %v760, %v1574
        %1576 = vdwg.mxu0
        %1577 = vmatpush.bf16.msra.mxu0 %v1212
        %1578 = vmatpush.bf16.msra.mxu0 %v1208
        %1579 = vmatpush.bf16.msra.mxu0 %v1204
        %1580 = vmatpush.bf16.msra.mxu0 %v1200
        %1581 = vmatpush.bf16.msra.mxu0 %v1196
        %1582 = vmatpush.bf16.msra.mxu0 %v1192
        %1583 = vmatpush.bf16.msra.mxu0 %v1188
        %1584 = vmatpush.bf16.msra.mxu0 %v1184
        %1585 = vmatmul.bf16.gmra.mxu0 %v621
        %v1586 = vpop.f32.mrf.mxu0
        %v1587 = vadd.f32 %v1568, %v1586
        %v1588 = vpop.f32.mrf.mxu0
        %v1589 = vadd.f32 %v1570, %v1588
        %1590 = vmatmul.bf16.gmra.mxu0 %v625
        %v1591 = vpop.f32.mrf.mxu0
        %v1592 = vadd.f32 %v1573, %v1591
        %v1593 = vpop.f32.mrf.mxu0
        %v1594 = vadd.f32 %v1575, %v1593
        %1595 = vdwg.mxu0
        %1596 = vmatpush.bf16.msra.mxu0 %v1244
        %1597 = vmatpush.bf16.msra.mxu0 %v1240
        %1598 = vmatpush.bf16.msra.mxu0 %v1236
        %1599 = vmatpush.bf16.msra.mxu0 %v1232
        %1600 = vmatpush.bf16.msra.mxu0 %v1228
        %1601 = vmatpush.bf16.msra.mxu0 %v1224
        %1602 = vmatpush.bf16.msra.mxu0 %v1220
        %1603 = vmatpush.bf16.msra.mxu0 %v1216
        %1604 = vmatmul.bf16.gmra.mxu0 %v622
        %v1605 = vpop.f32.mrf.mxu0
        %v1606 = vadd.f32 %v1587, %v1605
        %v1607 = vpop.f32.mrf.mxu0
        %v1608 = vadd.f32 %v1589, %v1607
        %1609 = vmatmul.bf16.gmra.mxu0 %v626
        %v1610 = vpop.f32.mrf.mxu0
        %v1611 = vadd.f32 %v1592, %v1610
        %v1612 = vpop.f32.mrf.mxu0
        %v1613 = vadd.f32 %v1594, %v1612
        %1614 = vdwg.mxu0
        %1615 = vmatpush.bf16.msra.mxu0 %v1276
        %1616 = vmatpush.bf16.msra.mxu0 %v1272
        %1617 = vmatpush.bf16.msra.mxu0 %v1268
        %1618 = vmatpush.bf16.msra.mxu0 %v1264
        %1619 = vmatpush.bf16.msra.mxu0 %v1260
        %1620 = vmatpush.bf16.msra.mxu0 %v1256
        %1621 = vmatpush.bf16.msra.mxu0 %v1252
        %1622 = vmatpush.bf16.msra.mxu0 %v1248
        %1623 = vmatmul.bf16.gmra.mxu0 %v623
        %v1624 = vpop.f32.mrf.mxu0
        %v1625 = vadd.f32 %v1606, %v1624
        %v1626 = vpop.f32.mrf.mxu0
        %v1627 = vadd.f32 %v1608, %v1626
        %1628 = vmatmul.bf16.gmra.mxu0 %v627
        %v1629 = vpop.f32.mrf.mxu0
        %v1630 = vadd.f32 %v1611, %v1629
        %v1631 = vpop.f32.mrf.mxu0
        %v1632 = vadd.f32 %v1613, %v1631
        %1633 = vdwg.mxu0
        %1634 = vmatpush.bf16.msra.mxu0 %v1181
        %1635 = vmatpush.bf16.msra.mxu0 %v1177
        %1636 = vmatpush.bf16.msra.mxu0 %v1173
        %1637 = vmatpush.bf16.msra.mxu0 %v1169
        %1638 = vmatpush.bf16.msra.mxu0 %v1165
        %1639 = vmatpush.bf16.msra.mxu0 %v1161
        %1640 = vmatpush.bf16.msra.mxu0 %v1157
        %1641 = vmatpush.bf16.msra.mxu0 %v1153
        %1642 = vmatmul.bf16.gmra.mxu0 %v620
        %v1643 = vpop.f32.mrf.mxu0
        %v1644 = vadd.f32 %v761, %v1643
        %v1645 = vpop.f32.mrf.mxu0
        %v1646 = vadd.f32 %v761, %v1645
        %1647 = vmatmul.bf16.gmra.mxu0 %v624
        %v1648 = vpop.f32.mrf.mxu0
        %v1649 = vadd.f32 %v761, %v1648
        %v1650 = vpop.f32.mrf.mxu0
        %v1651 = vadd.f32 %v761, %v1650
        %1652 = vdwg.mxu0
        %1653 = vmatpush.bf16.msra.mxu0 %v1213
        %1654 = vmatpush.bf16.msra.mxu0 %v1209
        %1655 = vmatpush.bf16.msra.mxu0 %v1205
        %1656 = vmatpush.bf16.msra.mxu0 %v1201
        %1657 = vmatpush.bf16.msra.mxu0 %v1197
        %1658 = vmatpush.bf16.msra.mxu0 %v1193
        %1659 = vmatpush.bf16.msra.mxu0 %v1189
        %1660 = vmatpush.bf16.msra.mxu0 %v1185
        %1661 = vmatmul.bf16.gmra.mxu0 %v621
        %v1662 = vpop.f32.mrf.mxu0
        %v1663 = vadd.f32 %v1644, %v1662
        %v1664 = vpop.f32.mrf.mxu0
        %v1665 = vadd.f32 %v1646, %v1664
        %1666 = vmatmul.bf16.gmra.mxu0 %v625
        %v1667 = vpop.f32.mrf.mxu0
        %v1668 = vadd.f32 %v1649, %v1667
        %v1669 = vpop.f32.mrf.mxu0
        %v1670 = vadd.f32 %v1651, %v1669
        %1671 = vdwg.mxu0
        %1672 = vmatpush.bf16.msra.mxu0 %v1245
        %1673 = vmatpush.bf16.msra.mxu0 %v1241
        %1674 = vmatpush.bf16.msra.mxu0 %v1237
        %1675 = vmatpush.bf16.msra.mxu0 %v1233
        %1676 = vmatpush.bf16.msra.mxu0 %v1229
        %1677 = vmatpush.bf16.msra.mxu0 %v1225
        %1678 = vmatpush.bf16.msra.mxu0 %v1221
        %1679 = vmatpush.bf16.msra.mxu0 %v1217
        %1680 = vmatmul.bf16.gmra.mxu0 %v622
        %v1681 = vpop.f32.mrf.mxu0
        %v1682 = vadd.f32 %v1663, %v1681
        %v1683 = vpop.f32.mrf.mxu0
        %v1684 = vadd.f32 %v1665, %v1683
        %1685 = vmatmul.bf16.gmra.mxu0 %v626
        %v1686 = vpop.f32.mrf.mxu0
        %v1687 = vadd.f32 %v1668, %v1686
        %v1688 = vpop.f32.mrf.mxu0
        %v1689 = vadd.f32 %v1670, %v1688
        %1690 = vdwg.mxu0
        %1691 = vmatpush.bf16.msra.mxu0 %v1277
        %1692 = vmatpush.bf16.msra.mxu0 %v1273
        %1693 = vmatpush.bf16.msra.mxu0 %v1269
        %1694 = vmatpush.bf16.msra.mxu0 %v1265
        %1695 = vmatpush.bf16.msra.mxu0 %v1261
        %1696 = vmatpush.bf16.msra.mxu0 %v1257
        %1697 = vmatpush.bf16.msra.mxu0 %v1253
        %1698 = vmatpush.bf16.msra.mxu0 %v1249
        %1699 = vmatmul.bf16.gmra.mxu0 %v623
        %v1700 = vpop.f32.mrf.mxu0
        %v1701 = vadd.f32 %v1682, %v1700
        %v1702 = vpop.f32.mrf.mxu0
        %v1703 = vadd.f32 %v1684, %v1702
        %1704 = vmatmul.bf16.gmra.mxu0 %v627
        %v1705 = vpop.f32.mrf.mxu0
        %v1706 = vadd.f32 %v1687, %v1705
        %v1707 = vpop.f32.mrf.mxu0
        %v1708 = vadd.f32 %v1689, %v1707
        %1709 = vdwg.mxu0
        %v1710 = vmax.f32 %v1473, 0.0
        %v1711 = vmax.f32 %v1549, 0.0
        %v1712 = vmax.f32 %v1625, 0.0
        %v1713 = vmax.f32 %v1701, 0.0
        %v1714 = vmax.f32 %v1475, 0.0
        %v1715 = vmax.f32 %v1551, 0.0
        %v1716 = vmax.f32 %v1627, 0.0
        %v1717 = vmax.f32 %v1703, 0.0
        %v1718 = vmax.f32 %v1478, 0.0
        %v1719 = vmax.f32 %v1554, 0.0
        %v1720 = vmax.f32 %v1630, 0.0
        %v1721 = vmax.f32 %v1706, 0.0
        %v1722 = vmax.f32 %v1480, 0.0
        %v1723 = vmax.f32 %v1556, 0.0
        %v1724 = vmax.f32 %v1632, 0.0
        %v1725 = vmax.f32 %v1708, 0.0
        %v1726 = vpack.c.bf16 %v1714, %v1710
        %v1727 = vpack.c.bf16 %v1715, %v1711
        %v1728 = vpack.c.bf16 %v1716, %v1712
        %v1729 = vpack.c.bf16 %v1717, %v1713
        %v1730 = vpack.c.bf16 %v1722, %v1718
        %v1731 = vpack.c.bf16 %v1723, %v1719
        %v1732 = vpack.c.bf16 %v1724, %v1720
        %v1733 = vpack.c.bf16 %v1725, %v1721
        %v1734 = vld [vmem:[%s5] sm:$0xf]
        %v1735 = vld [vmem:[%s5 + $0x4] sm:$0xf]
        %v1736 = vld [vmem:[%s5 + $0x8] sm:$0xf]
        %v1737 = vld [vmem:[%s5 + $0xc] sm:$0xf]
        %v1738 = vld [vmem:[%s5 + $0x10] sm:$0xf]
        %v1739 = vld [vmem:[%s5 + $0x14] sm:$0xf]
        %v1740 = vld [vmem:[%s5 + $0x18] sm:$0xf]
        %v1741 = vld [vmem:[%s5 + $0x1c] sm:$0xf]
        %v1742 = vld [vmem:[%s5 + $0x20] sm:$0xf]
        %v1743 = vld [vmem:[%s5 + $0x24] sm:$0xf]
        %v1744 = vld [vmem:[%s5 + $0x28] sm:$0xf]
        %v1745 = vld [vmem:[%s5 + $0x2c] sm:$0xf]
        %v1746 = vld [vmem:[%s5 + $0x30] sm:$0xf]
        %v1747 = vld [vmem:[%s5 + $0x34] sm:$0xf]
        %v1748 = vld [vmem:[%s5 + $0x38] sm:$0xf]
        %v1749 = vld [vmem:[%s5 + $0x3c] sm:$0xf]
        %v1750 = vld [vmem:[%s5 + $0x40] sm:$0xf]
        %v1751 = vld [vmem:[%s5 + $0x44] sm:$0xf]
        %v1752 = vld [vmem:[%s5 + $0x48] sm:$0xf]
        %v1753 = vld [vmem:[%s5 + $0x4c] sm:$0xf]
        %v1754 = vld [vmem:[%s5 + $0x50] sm:$0xf]
        %v1755 = vld [vmem:[%s5 + $0x54] sm:$0xf]
        %v1756 = vld [vmem:[%s5 + $0x58] sm:$0xf]
        %v1757 = vld [vmem:[%s5 + $0x5c] sm:$0xf]
        %v1758 = vld [vmem:[%s5 + $0x60] sm:$0xf]
        %v1759 = vld [vmem:[%s5 + $0x64] sm:$0xf]
        %v1760 = vld [vmem:[%s5 + $0x68] sm:$0xf]
        %v1761 = vld [vmem:[%s5 + $0x6c] sm:$0xf]
        %v1762 = vld [vmem:[%s5 + $0x70] sm:$0xf]
        %v1763 = vld [vmem:[%s5 + $0x74] sm:$0xf]
        %v1764 = vld [vmem:[%s5 + $0x78] sm:$0xf]
        %v1765 = vld [vmem:[%s5 + $0x7c] sm:$0xf]
        %v1766 = vld [vmem:[%s5 + $0x80] sm:$0xf]
        %v1767 = vld [vmem:[%s5 + $0x84] sm:$0xf]
        %v1768 = vld [vmem:[%s5 + $0x88] sm:$0xf]
        %v1769 = vld [vmem:[%s5 + $0x8c] sm:$0xf]
        %v1770 = vld [vmem:[%s5 + $0x90] sm:$0xf]
        %v1771 = vld [vmem:[%s5 + $0x94] sm:$0xf]
        %v1772 = vld [vmem:[%s5 + $0x98] sm:$0xf]
        %v1773 = vld [vmem:[%s5 + $0x9c] sm:$0xf]
        %v1774 = vld [vmem:[%s5 + $0xa0] sm:$0xf]
        %v1775 = vld [vmem:[%s5 + $0xa4] sm:$0xf]
        %v1776 = vld [vmem:[%s5 + $0xa8] sm:$0xf]
        %v1777 = vld [vmem:[%s5 + $0xac] sm:$0xf]
        %v1778 = vld [vmem:[%s5 + $0xb0] sm:$0xf]
        %v1779 = vld [vmem:[%s5 + $0xb4] sm:$0xf]
        %v1780 = vld [vmem:[%s5 + $0xb8] sm:$0xf]
        %v1781 = vld [vmem:[%s5 + $0xbc] sm:$0xf]
        %v1782 = vld [vmem:[%s5 + $0xc0] sm:$0xf]
        %v1783 = vld [vmem:[%s5 + $0xc4] sm:$0xf]
        %v1784 = vld [vmem:[%s5 + $0xc8] sm:$0xf]
        %v1785 = vld [vmem:[%s5 + $0xcc] sm:$0xf]
        %v1786 = vld [vmem:[%s5 + $0xd0] sm:$0xf]
        %v1787 = vld [vmem:[%s5 + $0xd4] sm:$0xf]
        %v1788 = vld [vmem:[%s5 + $0xd8] sm:$0xf]
        %v1789 = vld [vmem:[%s5 + $0xdc] sm:$0xf]
        %v1790 = vld [vmem:[%s5 + $0xe0] sm:$0xf]
        %v1791 = vld [vmem:[%s5 + $0xe4] sm:$0xf]
        %v1792 = vld [vmem:[%s5 + $0xe8] sm:$0xf]
        %v1793 = vld [vmem:[%s5 + $0xec] sm:$0xf]
        %v1794 = vld [vmem:[%s5 + $0xf0] sm:$0xf]
        %v1795 = vld [vmem:[%s5 + $0xf4] sm:$0xf]
        %v1796 = vld [vmem:[%s5 + $0xf8] sm:$0xf]
        %v1797 = vld [vmem:[%s5 + $0xfc] sm:$0xf]
        %v1798 = vld [vmem:[%s6] sm:$0x1]
        %v1800 = vperm.slane %v1798, 0
        %v1866 = vunpack.c.l.b16 %v1734
        %v1867 = vunpack.c.l.b16 %v1735
        %v1868 = vunpack.c.l.b16 %v1736
        %v1869 = vunpack.c.l.b16 %v1737
        %v1870 = vunpack.c.l.b16 %v1738
        %v1871 = vunpack.c.l.b16 %v1739
        %v1872 = vunpack.c.l.b16 %v1740
        %v1873 = vunpack.c.l.b16 %v1741
        %v1874 = vunpack.c.l.b16 %v1742
        %v1875 = vunpack.c.l.b16 %v1743
        %v1876 = vunpack.c.l.b16 %v1744
        %v1877 = vunpack.c.l.b16 %v1745
        %v1878 = vunpack.c.l.b16 %v1746
        %v1879 = vunpack.c.l.b16 %v1747
        %v1880 = vunpack.c.l.b16 %v1748
        %v1881 = vunpack.c.l.b16 %v1749
        %v1882 = vunpack.c.l.b16 %v1750
        %v1883 = vunpack.c.l.b16 %v1751
        %v1884 = vunpack.c.l.b16 %v1752
        %v1885 = vunpack.c.l.b16 %v1753
        %v1886 = vunpack.c.l.b16 %v1754
        %v1887 = vunpack.c.l.b16 %v1755
        %v1888 = vunpack.c.l.b16 %v1756
        %v1889 = vunpack.c.l.b16 %v1757
        %v1890 = vunpack.c.l.b16 %v1758
        %v1891 = vunpack.c.l.b16 %v1759
        %v1892 = vunpack.c.l.b16 %v1760
        %v1893 = vunpack.c.l.b16 %v1761
        %v1894 = vunpack.c.l.b16 %v1762
        %v1895 = vunpack.c.l.b16 %v1763
        %v1896 = vunpack.c.l.b16 %v1764
        %v1897 = vunpack.c.l.b16 %v1765
        %v1898 = vunpack.c.l.b16 %v1766
        %v1899 = vunpack.c.l.b16 %v1767
        %v1900 = vunpack.c.l.b16 %v1768
        %v1901 = vunpack.c.l.b16 %v1769
        %v1902 = vunpack.c.l.b16 %v1770
        %v1903 = vunpack.c.l.b16 %v1771
        %v1904 = vunpack.c.l.b16 %v1772
        %v1905 = vunpack.c.l.b16 %v1773
        %v1906 = vunpack.c.l.b16 %v1774
        %v1907 = vunpack.c.l.b16 %v1775
        %v1908 = vunpack.c.l.b16 %v1776
        %v1909 = vunpack.c.l.b16 %v1777
        %v1910 = vunpack.c.l.b16 %v1778
        %v1911 = vunpack.c.l.b16 %v1779
        %v1912 = vunpack.c.l.b16 %v1780
        %v1913 = vunpack.c.l.b16 %v1781
        %v1914 = vunpack.c.l.b16 %v1782
        %v1915 = vunpack.c.l.b16 %v1783
        %v1916 = vunpack.c.l.b16 %v1784
        %v1917 = vunpack.c.l.b16 %v1785
        %v1918 = vunpack.c.l.b16 %v1786
        %v1919 = vunpack.c.l.b16 %v1787
        %v1920 = vunpack.c.l.b16 %v1788
        %v1921 = vunpack.c.l.b16 %v1789
        %v1922 = vunpack.c.l.b16 %v1790
        %v1923 = vunpack.c.l.b16 %v1791
        %v1924 = vunpack.c.l.b16 %v1792
        %v1925 = vunpack.c.l.b16 %v1793
        %v1926 = vunpack.c.l.b16 %v1794
        %v1927 = vunpack.c.l.b16 %v1795
        %v1928 = vunpack.c.l.b16 %v1796
        %v1929 = vunpack.c.l.b16 %v1797
        %v1930 = vpack.c.b16 %v1867, %v1866
        %v1931 = vpack.c.b16 %v1869, %v1868
        %v1932 = vpack.c.b16 %v1871, %v1870
        %v1933 = vpack.c.b16 %v1873, %v1872
        %v1934 = vpack.c.b16 %v1875, %v1874
        %v1935 = vpack.c.b16 %v1877, %v1876
        %v1936 = vpack.c.b16 %v1879, %v1878
        %v1937 = vpack.c.b16 %v1881, %v1880
        %v1938 = vpack.c.b16 %v1883, %v1882
        %v1939 = vpack.c.b16 %v1885, %v1884
        %v1940 = vpack.c.b16 %v1887, %v1886
        %v1941 = vpack.c.b16 %v1889, %v1888
        %v1942 = vpack.c.b16 %v1891, %v1890
        %v1943 = vpack.c.b16 %v1893, %v1892
        %v1944 = vpack.c.b16 %v1895, %v1894
        %v1945 = vpack.c.b16 %v1897, %v1896
        %v1946 = vpack.c.b16 %v1899, %v1898
        %v1947 = vpack.c.b16 %v1901, %v1900
        %v1948 = vpack.c.b16 %v1903, %v1902
        %v1949 = vpack.c.b16 %v1905, %v1904
        %v1950 = vpack.c.b16 %v1907, %v1906
        %v1951 = vpack.c.b16 %v1909, %v1908
        %v1952 = vpack.c.b16 %v1911, %v1910
        %v1953 = vpack.c.b16 %v1913, %v1912
        %v1954 = vpack.c.b16 %v1915, %v1914
        %v1955 = vpack.c.b16 %v1917, %v1916
        %v1956 = vpack.c.b16 %v1919, %v1918
        %v1957 = vpack.c.b16 %v1921, %v1920
        %v1958 = vpack.c.b16 %v1923, %v1922
        %v1959 = vpack.c.b16 %v1925, %v1924
        %v1960 = vpack.c.b16 %v1927, %v1926
        %v1961 = vpack.c.b16 %v1929, %v1928
        %1994 = vmatpush.bf16.msra.mxu0 %v1937
        %1995 = vmatpush.bf16.msra.mxu0 %v1936
        %1996 = vmatpush.bf16.msra.mxu0 %v1935
        %1997 = vmatpush.bf16.msra.mxu0 %v1934
        %1998 = vmatpush.bf16.msra.mxu0 %v1933
        %1999 = vmatpush.bf16.msra.mxu0 %v1932
        %2000 = vmatpush.bf16.msra.mxu0 %v1931
        %2001 = vmatpush.bf16.msra.mxu0 %v1930
        %2002 = vmatmul.bf16.gmra.mxu0 %v1726
        %v2003 = vpop.f32.mrf.mxu0
        %v2004 = vadd.f32 %v1800, %v2003
        %v2005 = vpop.f32.mrf.mxu0
        %v2006 = vadd.f32 %v1800, %v2005
        %2007 = vmatmul.bf16.gmra.mxu0 %v1730
        %v2008 = vpop.f32.mrf.mxu0
        %v2009 = vadd.f32 %v1800, %v2008
        %v2010 = vpop.f32.mrf.mxu0
        %v2011 = vadd.f32 %v1800, %v2010
        %2012 = vdwg.mxu0
        %2013 = vmatpush.bf16.msra.mxu0 %v1945
        %2014 = vmatpush.bf16.msra.mxu0 %v1944
        %2015 = vmatpush.bf16.msra.mxu0 %v1943
        %2016 = vmatpush.bf16.msra.mxu0 %v1942
        %2017 = vmatpush.bf16.msra.mxu0 %v1941
        %2018 = vmatpush.bf16.msra.mxu0 %v1940
        %2019 = vmatpush.bf16.msra.mxu0 %v1939
        %2020 = vmatpush.bf16.msra.mxu0 %v1938
        %2021 = vmatmul.bf16.gmra.mxu0 %v1727
        %v2022 = vpop.f32.mrf.mxu0
        %v2023 = vadd.f32 %v2004, %v2022
        %v2024 = vpop.f32.mrf.mxu0
        %v2025 = vadd.f32 %v2006, %v2024
        %2026 = vmatmul.bf16.gmra.mxu0 %v1731
        %v2027 = vpop.f32.mrf.mxu0
        %v2028 = vadd.f32 %v2009, %v2027
        %v2029 = vpop.f32.mrf.mxu0
        %v2030 = vadd.f32 %v2011, %v2029
        %2031 = vdwg.mxu0
        %2032 = vmatpush.bf16.msra.mxu0 %v1953
        %2033 = vmatpush.bf16.msra.mxu0 %v1952
        %2034 = vmatpush.bf16.msra.mxu0 %v1951
        %2035 = vmatpush.bf16.msra.mxu0 %v1950
        %2036 = vmatpush.bf16.msra.mxu0 %v1949
        %2037 = vmatpush.bf16.msra.mxu0 %v1948
        %2038 = vmatpush.bf16.msra.mxu0 %v1947
        %2039 = vmatpush.bf16.msra.mxu0 %v1946
        %2040 = vmatmul.bf16.gmra.mxu0 %v1728
        %v2041 = vpop.f32.mrf.mxu0
        %v2042 = vadd.f32 %v2023, %v2041
        %v2043 = vpop.f32.mrf.mxu0
        %v2044 = vadd.f32 %v2025, %v2043
        %2045 = vmatmul.bf16.gmra.mxu0 %v1732
        %v2046 = vpop.f32.mrf.mxu0
        %v2047 = vadd.f32 %v2028, %v2046
        %v2048 = vpop.f32.mrf.mxu0
        %v2049 = vadd.f32 %v2030, %v2048
        %2050 = vdwg.mxu0
        %2051 = vmatpush.bf16.msra.mxu0 %v1961
        %2052 = vmatpush.bf16.msra.mxu0 %v1960
        %2053 = vmatpush.bf16.msra.mxu0 %v1959
        %2054 = vmatpush.bf16.msra.mxu0 %v1958
        %2055 = vmatpush.bf16.msra.mxu0 %v1957
        %2056 = vmatpush.bf16.msra.mxu0 %v1956
        %2057 = vmatpush.bf16.msra.mxu0 %v1955
        %2058 = vmatpush.bf16.msra.mxu0 %v1954
        %2059 = vmatmul.bf16.gmra.mxu0 %v1729
        %v2060 = vpop.f32.mrf.mxu0
        %v2061 = vadd.f32 %v2042, %v2060
        %v2062 = vpop.f32.mrf.mxu0
        %v2063 = vadd.f32 %v2044, %v2062
        %2064 = vmatmul.bf16.gmra.mxu0 %v1733
        %v2065 = vpop.f32.mrf.mxu0
        %v2066 = vadd.f32 %v2047, %v2065
        %v2067 = vpop.f32.mrf.mxu0
        %v2068 = vadd.f32 %v2049, %v2067
        %2069 = vdwg.mxu0
        %v2070 = vsub.f32 0.0, %v2061
        %v2071 = vsub.f32 0.0, %v2063
        %v2072 = vsub.f32 0.0, %v2066
        %v2073 = vsub.f32 0.0, %v2068
        %v2074 = vmul.f32 %v2070, 1.442695
        %v2075 = vpow.pop %v2074
        %v2076 = vmul.f32 %v2071, 1.442695
        %v2077 = vpow.pop %v2076
        %v2078 = vmul.f32 %v2072, 1.442695
        %v2079 = vpow.pop %v2078
        %v2080 = vmul.f32 %v2073, 1.442695
        %v2081 = vpow.pop %v2080
        %v2082 = vadd.f32 %v2075, 1.0
        %v2083 = vadd.f32 %v2077, 1.0
        %v2084 = vadd.f32 %v2079, 1.0
        %v2085 = vadd.f32 %v2081, 1.0
        %v2086 = vrcp.pop %v2082
        %v2087 = vrcp.pop %v2083
        %v2088 = vrcp.pop %v2084
        %v2089 = vrcp.pop %v2085
        %vm2090 = vcmask 195584
        %2091 = vst.msk [vmem:[%s318] sm:$0xff] %vm2090, %v2086
        %2092 = vst.msk [vmem:[%s318 + $0x8] sm:$0xff] %vm2090, %v2087
        %2093 = vst.msk [vmem:[%s318 + $0x10] sm:$0xff] %vm2090, %v2088
        %2094 = vst.msk [vmem:[%s318 + $0x18] sm:$0xff] %vm2090, %v2089
        %s2095 = smul.u32 4, %s22
        %p2096 = scmp.lt.s32.totalorder %s2095, 7
        %s2097 = scalar_select %p2096, %s2095, 7
        %s2098 = smul.addr %s2097, 8
        %s2099 = scalar_lea.vmem %s7, %s2098
        // Predicated region
        $region57: #{tpu_custom_call.1} parent=47 // pred_check
          %p2100 = pneg %p192
        $region58: #{tpu_custom_call.1} parent=47 // pred_check_branch
          %2102 = sbr.rel (%p2100) target = $region60
        $region59: #{tpu_custom_call.1} parent=47 // pred_region
          %s2103 = smul.u32 4, %s22
        $region60: #{tpu_custom_call.1} parent=47 // pred_fallthru
          _
      $region48: #{tpu_custom_call.1} parent=5 // pred_fallthru
        _
      %p2104 = scmp.le.s32.totalorder 2, %s17
      // Predicated region
      $region61: #{tpu_custom_call.1} parent=5 // pred_check
        %p2105 = pneg %p2104
      $region62: #{tpu_custom_call.1} parent=5 // pred_check_branch
        %2107 = sbr.rel (%p2105) target = $region64
      $region63: #{tpu_custom_call.1} parent=5 // pred_region
        %s2108 = ssub.s32 %s17, 2
        // Predicated region
        $region65: #{tpu_custom_call.1} parent=63 // pred_check
          %p2109 = pneg %p198
        $region66: #{tpu_custom_call.1} parent=63 // pred_check_branch
          %2111 = sbr.rel (%p2109) target = $region68
        $region67: #{tpu_custom_call.1} parent=63 // pred_region
          %s2112 = smul.u32 4, %s23
          %p2113 = scmp.lt.s32.totalorder %s2112, 7
          %s2114 = scalar_select %p2113, %s2112, 7
          %s2115 = smul.addr %s2114, 8
          %s2116 = scalar_lea.vmem %s7, %s2115
        $region68: #{tpu_custom_call.1} parent=63 // pred_fallthru
          _
      $region64: #{tpu_custom_call.1} parent=5 // pred_fallthru
        _
    $region6: #{tpu_custom_call.1} parent=1 // loop_footer
      %s21 = sadd.s32 1, %s17
    $region7: #{tpu_custom_call.1} parent=1 // loop_footer_branch
      %16 = sbr.rel target = $region3
    $region8: #{tpu_custom_call.1} parent=1 // loop_exit
      _
    %2117 = vsyncpa [#allocation3], 1
    %s2118 = scalar_lea.sflag [#allocation3], 1
    %2119 = vsyncpa %s2118, 1
    %2120 = vsyncpa [#allocation5], 1

</llo_original>
